<compile_context>
chip_gen: v5e
topology: v5e:2x2
jax: 0.10.0
libtpu: 0.0.40
codegen_flags: <defaults>
</compile_context>

<pallas_src>
import functools

import jax
import jax.numpy as jnp
import numpy as np
from jax.experimental import pallas as pl
from jax.experimental.pallas import tpu as pltpu


def _criterion_kernel(bt_ref, bcols_ref, tt_ref, tcols_ref,
                      labc_ref, labr_ref, wnt_ref, out_ref,
                      *, inv_temp, inv_tau, beta, f_std):
    """One grid step: `tq` anchor rows vs. the full batch.

    Writes a lane-dense (tq, 128) slab: lane 0 = per-row CE term, lane 1 = per-row KL.
    All RHS operands arrive pre-transposed, so every dot is a native (M,K)@(K,N).
    """
    bt = bt_ref[...]          # (tq, Dp)   native dtype (bf16 stays bf16 for the MXU)
    bcols = bcols_ref[...]    # (Dp, B)    resident, pre-transposed
    tt = tt_ref[...]          # (tq, Dtp)
    tcols = tcols_ref[...]    # (Dtp, B)   resident, pre-transposed
    labc = labc_ref[...]      # (tq, 1) int32
    labr = labr_ref[...]      # (1,  B) int32
    wnt = wnt_ref[...]        # (Dp, C)    pre-normalized + pre-transposed class map

    # ---------------- cross-entropy ("loss_rank") branch ----------------
    logits = jnp.dot(bt, wnt, preferred_element_type=jnp.float32) * inv_temp  # (tq,C)
    m = jnp.max(logits, axis=1, keepdims=True)
    lse = m + jnp.log(jnp.sum(jnp.exp(logits - m), axis=1, keepdims=True))
    class_ids = jax.lax.broadcasted_iota(jnp.int32, logits.shape, 1)
    onehot = (class_ids == labc).astype(jnp.float32)
    picked = jnp.sum(logits * onehot, axis=1, keepdims=True)
    ce_rows = lse - picked                                                    # (tq,1)

    # ---------------- KD branch ----------------
    sim = jnp.dot(bt, bcols, preferred_element_type=jnp.float32)              # (tq,B)
    tsim = jnp.dot(tt, tcols, preferred_element_type=jnp.float32)             # (tq,B)

    if f_std:
        # standard distillation: no mask / scale needed, just 1/tau.
        s = sim * inv_tau
        t = tsim * inv_tau
    else:
        same = labc == labr                                                   # (tq,B)
        scale = jnp.where(same, jnp.float32(inv_tau),
                          jnp.float32(beta * inv_tau))
        s = sim * scale
        t = tsim * scale

    ms = jnp.max(s, axis=1, keepdims=True)
    mt = jnp.max(t, axis=1, keepdims=True)
    es = jnp.exp(s - ms)
    et = jnp.exp(t - mt)
    zs = jnp.sum(es, axis=1, keepdims=True)
    zt = jnp.sum(et, axis=1, keepdims=True)
    # Fused KL (1/zt folded into a single (tq,1) scale; no (tq,B) log/softmax temps).
    num = jnp.sum(et * (t - s), axis=1, keepdims=True)
    kl_rows = num / zt - (mt - ms) - (jnp.log(zt) - jnp.log(zs))              # (tq,1)

    lane = jax.lax.broadcasted_iota(jnp.int32, out_ref.shape, 1)              # (tq,128)
    out_ref[...] = jnp.where(lane == 0, ce_rows,
                             jnp.where(lane == 1, kl_rows, jnp.float32(0.0)))


def _pad_lanes(x):
    """Zero-pad the last dim to a multiple of 128 (lane alignment; dots unchanged)."""
    d = x.shape[-1]
    dp = pl.cdiv(d, 128) * 128
    if dp == d:
        return x
    return jnp.pad(x, ((0, 0), (0, dp - d)))


def _vmem_capacity_bytes():
    """Per-core VMEM capacity; conservative fallback if the query is unavailable."""
    try:
        info = pltpu.get_tpu_info()
        cap = getattr(info, "vmem_capacity_bytes", None)
        if cap:
            return int(cap)
    except Exception:
        pass
    return 64 * 1024 * 1024  # v7x per-TC (most restrictive generation)


def _pick_tq(B, dtype):
    """Largest row tile dividing B: <=128 (f32) / <=256 (bf16), multiple of 8 (16 for
    bf16 sublane packing), preferring >=2 grid steps so v7x megacore can split."""
    is_bf16 = jnp.dtype(dtype) == jnp.dtype(jnp.bfloat16)
    sub = 16 if is_bf16 else 8
    cap = 256 if is_bf16 else 128
    cands = [t for t in range(sub, min(B, cap) + 1, sub) if B % t == 0]
    if not cands:
        cands = [t for t in range(8, min(B, cap) + 1, 8) if B % t == 0]
    if not cands:
        return B
    two_step = [t for t in cands if B // t >= 2]
    return max(two_step) if two_step else max(cands)


@functools.partial(
    jax.jit,
    static_argnames=("temperature", "tau", "alpha", "beta", "n_epochs",
                     "f_distillation_standard", "tq", "single_buffer_residents"))
def _softmax_lsd_impl(batch, teacher_batch, labels, epoch, class_map, *,
                      temperature, tau, alpha, beta, n_epochs,
                      f_distillation_standard, tq, single_buffer_residents):
    B, _ = batch.shape
    C, _ = class_map.shape
    assert tq % 8 == 0 and B % tq == 0, "row tile must be a multiple of 8 dividing B"

    # Hoisted class-map L2 normalization (runs once in XLA, not per grid step).
    cm = class_map.astype(jnp.float32)
    norm = jnp.sqrt(jnp.sum(cm * cm, axis=1, keepdims=True))
    wn = (cm / jnp.maximum(norm, 1e-12)).astype(batch.dtype)

    batch_p = _pad_lanes(batch)
    teacher_p = _pad_lanes(teacher_batch)
    wn_p = _pad_lanes(wn)
    Dp = batch_p.shape[-1]
    Dtp = teacher_p.shape[-1]

    # One-time XLA transposes: every in-kernel matmul becomes native (M,K)@(K,N),
    # removing the per-grid-step XLU transpose of the resident blocks.
    batch_cols = batch_p.T        # (Dp,  B)
    teacher_cols = teacher_p.T    # (Dtp, B)
    wn_t = wn_p.T                 # (Dp,  C)

    labels_i32 = labels.astype(jnp.int32)
    labels_col = labels_i32.reshape(B, 1)
    labels_row = labels_i32.reshape(1, B)

    nt = B // tq

    kernel = functools.partial(
        _criterion_kernel,
        inv_temp=float(1.0 / temperature),
        inv_tau=float(1.0 / tau),
        beta=float(beta),
        f_std=bool(f_distillation_standard))

    itemsize = jnp.dtype(batch_p.dtype).itemsize

    # --- generation-aware VMEM budget ---
    resident = itemsize * (Dp * B + Dtp * B + Dp * C) + 4 * B        # constant blocks
    per_tile = itemsize * tq * (Dp + Dtp) + 4 * tq + 4 * tq * 128    # per-step blocks
    temps = 4 * tq * (6 * B + 2 * C)                                 # f32 temporaries
    rbuf = 1 if single_buffer_residents else 2
    needed = rbuf * resident + 2 * per_tile + temps + (4 << 20)
    cap = _vmem_capacity_bytes()
    vmem_limit = int(min(max(needed, 16 << 20), int(cap * 0.85)))

    cost = pl.CostEstimate(
        flops=int(2 * B * C * Dp + 2 * B * B * Dp + 2 * B * B * Dtp
                  + 12 * B * B + 6 * B * C),
        transcendentals=int(B * C + 2 * B * B + 4 * B),
        bytes_accessed=int(2 * B * Dp * itemsize + 2 * B * Dtp * itemsize
                           + C * Dp * itemsize + 8 * B + 4 * B * 128))

    # Constant-index residents: single-buffer (double buffering buys nothing, costs 2x
    # VMEM — the decisive factor under v7x's 64 MiB).
    resident_kw = (dict(pipeline_mode=pl.Buffered(1))
                   if single_buffer_residents else {})

    out = pl.pallas_call(
        kernel,
        grid=(nt,),
        in_specs=[
            pl.BlockSpec((tq, Dp), lambda i: (i, 0)),                    # batch rows
            pl.BlockSpec((Dp, B), lambda i: (0, 0), **resident_kw),      # batch cols^T
            pl.BlockSpec((tq, Dtp), lambda i: (i, 0)),                   # teacher rows
            pl.BlockSpec((Dtp, B), lambda i: (0, 0), **resident_kw),     # teacher cols^T
            pl.BlockSpec((tq, 1), lambda i: (i, 0)),                     # row labels
            pl.BlockSpec((1, B), lambda i: (0, 0), **resident_kw),       # col labels
            pl.BlockSpec((Dp, C), lambda i: (0, 0), **resident_kw),      # class map^T
        ],
        out_specs=pl.BlockSpec((tq, 128), lambda i: (i, 0)),
        out_shape=jax.ShapeDtypeStruct((B, 128), jnp.float32),
        compiler_params=pltpu.CompilerParams(
            dimension_semantics=("parallel",),
            vmem_limit_bytes=vmem_limit),
        cost_estimate=cost,
    )(batch_p, batch_cols, teacher_p, teacher_cols, labels_col, labels_row, wn_t)

    loss_rank = jnp.mean(out[:, 0])
    loss_kd = jnp.mean(out[:, 1])
    loss = loss_rank + (epoch / n_epochs) * alpha * (tau * tau) * loss_kd
    return loss, loss_rank, loss_kd


def softmax_lsd_loss(batch, teacher_batch, labels, epoch, class_map, *,
                     temperature, tau, alpha, beta, n_epochs,
                     f_distillation_standard=False, tq=None):
    """User-facing wrapper: auto row-tile selection + Buffered(1) fallback."""
    if tq is None:
        tq = _pick_tq(int(batch.shape[0]), batch.dtype)
    kw = dict(temperature=float(temperature), tau=float(tau), alpha=float(alpha),
              beta=float(beta), n_epochs=int(n_epochs),
              f_distillation_standard=bool(f_distillation_standard), tq=int(tq))
    try:
        return _softmax_lsd_impl(batch, teacher_batch, labels, epoch, class_map,
                                 single_buffer_residents=True, **kw)
    except Exception:
        # Fallback if this Pallas build rejects Buffered(1) on constant-index blocks.
        return _softmax_lsd_impl(batch, teacher_batch, labels, epoch, class_map,
                                 single_buffer_residents=False, **kw)


def _reference(batch, teacher, labels, class_map, temperature, tau, alpha,
               beta, f_std, epoch, n_epochs):
    """Pure-JAX reference (matmul precision follows the input dtype, like the kernel)."""
    cm = class_map.astype(jnp.float32)
    wn = (cm / jnp.maximum(jnp.linalg.norm(cm, axis=1, keepdims=True), 1e-12)
          ).astype(batch.dtype)

    def dot(a, b):
        return jax.lax.dot_general(a, b, (((1,), (1,)), ((), ())),
                                   preferred_element_type=jnp.float32)

    logits = dot(batch, wn) / temperature
    logp = jax.nn.log_softmax(logits, axis=1)
    loss_rank = -jnp.mean(logp[jnp.arange(batch.shape[0]), labels])

    sim = dot(batch, batch)
    tsim = dot(teacher, teacher)
    same = labels[:, None] == labels[None, :]
    scale = jnp.where(same | bool(f_std), 1.0, beta)
    s = sim * scale / tau
    t = tsim * scale / tau
    lp = jax.nn.log_softmax(s, axis=1)
    q = jax.nn.softmax(t, axis=1)
    kl = jnp.sum(q * (jnp.log(q) - lp), axis=1)
    loss_kd = jnp.mean(kl)
    loss = loss_rank + (epoch / n_epochs) * alpha * tau ** 2 * loss_kd
    return loss, loss_rank, loss_kd


if __name__ == "__main__":
    # ---- synthetic "opt" hyper-parameters / small shapes ----
    B, D, C = 16, 32, 16          # batch, embed_dim, n_classes
    temperature = 0.05            # opt.loss_softmax_temperature
    tau = 4.0                     # opt.kd_tau
    alpha = 0.5                   # opt.kd_alpha
    beta = 0.25                   # opt.kd_beta
    n_epochs = 10                 # opt.n_epochs
    epoch = 3

    key = jax.random.PRNGKey(0)
    k1, k2, k3, k4 = jax.random.split(key, 4)
    batch = jax.random.normal(k1, (B, D), dtype=jnp.float32)
    teacher_batch = jax.random.normal(k2, (B, D), dtype=jnp.float32)
    labels = jax.random.randint(k3, (B,), 0, C)

    # class_map ~ U(-stdv, stdv), stdv = 1/sqrt(embed_dim)
    stdv = 1.0 / np.sqrt(D)
    class_map = jax.random.uniform(k4, (C, D), minval=-stdv, maxval=stdv,
                                   dtype=jnp.float32)

    hp = dict(temperature=temperature, tau=tau, alpha=alpha, beta=beta,
              n_epochs=n_epochs)

    # ---- f32 path, f_distillation_standard=False (auto tq -> 8, 2 grid steps) ----
    out = softmax_lsd_loss(batch, teacher_batch, labels, epoch, class_map,
                           f_distillation_standard=False, **hp)
    jax.block_until_ready(out)
    ref = _reference(batch, teacher_batch, labels, class_map, temperature, tau,
                     alpha, beta, False, epoch, n_epochs)
    for got, want in zip(out, ref):
        np.testing.assert_allclose(np.asarray(got), np.asarray(want),
                                   rtol=2e-4, atol=2e-4)

    # ---- f32 path, f_distillation_standard=True (other static branch) ----
    out_s = softmax_lsd_loss(batch, teacher_batch, labels, epoch, class_map,
                             f_distillation_standard=True, **hp)
    jax.block_until_ready(out_s)
    ref_s = _reference(batch, teacher_batch, labels, class_map, temperature, tau,
                       alpha, beta, True, epoch, n_epochs)
    for got, want in zip(out_s, ref_s):
        np.testing.assert_allclose(np.asarray(got), np.asarray(want),
                                   rtol=2e-4, atol=2e-4)

    # ---- bf16 path (auto tq -> 16 for sublane packing; single grid step) ----
    batch_bf = batch.astype(jnp.bfloat16)
    teacher_bf = teacher_batch.astype(jnp.bfloat16)
    out_b = softmax_lsd_loss(batch_bf, teacher_bf, labels, epoch, class_map,
                             f_distillation_standard=False, **hp)
    jax.block_until_ready(out_b)
    ref_b = _reference(batch_bf, teacher_bf, labels, class_map, temperature, tau,
                       alpha, beta, False, epoch, n_epochs)
    for got, want in zip(out_b, ref_b):
        np.testing.assert_allclose(np.asarray(got), np.asarray(want),
                                   rtol=2e-3, atol=2e-3)

    print("KERNEL_OK")
</pallas_src>

<mosaic_0001>
module attributes {stable_mosaic.version = 11 : i64} {
  func.func @_criterion_kernel(%arg0: i32, %arg1: memref<8x128xf32, #tpu.memory_space<vmem>>, %arg2: memref<128x16xf32, #tpu.memory_space<vmem>>, %arg3: memref<8x128xf32, #tpu.memory_space<vmem>>, %arg4: memref<128x16xf32, #tpu.memory_space<vmem>>, %arg5: memref<8x1xi32, #tpu.memory_space<vmem>>, %arg6: memref<1x16xi32, #tpu.memory_space<vmem>>, %arg7: memref<128x16xf32, #tpu.memory_space<vmem>>, %arg8: memref<8x128xf32, #tpu.memory_space<vmem>>) attributes {dimension_semantics = [#tpu.dimension_semantics<parallel>], iteration_bounds = array<i64: 2>, scalar_prefetch = 0 : i64, scratch_operands = 0 : i64, tpu.core_type = #tpu.core_type<tc>, window_params = [{transform_indices = @transform_0, window_bounds = array<i64: 8, 128>}, {pipeline_mode = #tpu.pipeline_mode<synchronous>, transform_indices = @transform_1, window_bounds = array<i64: 128, 16>}, {transform_indices = @transform_2, window_bounds = array<i64: 8, 128>}, {pipeline_mode = #tpu.pipeline_mode<synchronous>, transform_indices = @transform_3, window_bounds = array<i64: 128, 16>}, {transform_indices = @transform_4, window_bounds = array<i64: 8, 1>}, {pipeline_mode = #tpu.pipeline_mode<synchronous>, transform_indices = @transform_5, window_bounds = array<i64: 1, 16>}, {pipeline_mode = #tpu.pipeline_mode<synchronous>, transform_indices = @transform_6, window_bounds = array<i64: 128, 16>}, {transform_indices = @transform_7, window_bounds = array<i64: 8, 128>}]} {
    %c0 = arith.constant 0 : index
    %c0_0 = arith.constant 0 : index
    %0 = vector.load %arg1[%c0, %c0_0] : memref<8x128xf32, #tpu.memory_space<vmem>>, vector<8x128xf32>
    %c0_1 = arith.constant 0 : index
    %c0_2 = arith.constant 0 : index
    %1 = vector.load %arg2[%c0_1, %c0_2] : memref<128x16xf32, #tpu.memory_space<vmem>>, vector<128x16xf32>
    %c0_3 = arith.constant 0 : index
    %c0_4 = arith.constant 0 : index
    %2 = vector.load %arg3[%c0_3, %c0_4] : memref<8x128xf32, #tpu.memory_space<vmem>>, vector<8x128xf32>
    %c0_5 = arith.constant 0 : index
    %c0_6 = arith.constant 0 : index
    %3 = vector.load %arg4[%c0_5, %c0_6] : memref<128x16xf32, #tpu.memory_space<vmem>>, vector<128x16xf32>
    %c0_7 = arith.constant 0 : index
    %c0_8 = arith.constant 0 : index
    %4 = vector.load %arg5[%c0_7, %c0_8] : memref<8x1xi32, #tpu.memory_space<vmem>>, vector<8x1xi32>
    %c0_9 = arith.constant 0 : index
    %c0_10 = arith.constant 0 : index
    %5 = vector.load %arg6[%c0_9, %c0_10] : memref<1x16xi32, #tpu.memory_space<vmem>>, vector<1x16xi32>
    %c0_11 = arith.constant 0 : index
    %c0_12 = arith.constant 0 : index
    %6 = vector.load %arg7[%c0_11, %c0_12] : memref<128x16xf32, #tpu.memory_space<vmem>>, vector<128x16xf32>
    %cst = arith.constant dense<0.000000e+00> : vector<8x16xf32>
    %7 = tpu.matmul %0, %6, %cst {dimension_numbers = #tpu.dot_dimension_numbers<[1], [0], [0], [1], [0, 0, 1, 1], [], []>} : vector<8x128xf32>, vector<128x16xf32>, vector<8x16xf32> -> vector<8x16xf32>
    %cst_13 = arith.constant 2.000000e+01 : f32
    %8 = vector.broadcast %cst_13 : f32 to vector<8x16xf32>
    %9 = arith.mulf %7, %8 : vector<8x16xf32>
    %cst_14 = arith.constant dense<0xFF800000> : vector<8xf32>
    %10 = vector.multi_reduction <maximumf>, %9, %cst_14 [1] : vector<8x16xf32> to vector<8xf32>
    %11 = vector.shape_cast %10 : vector<8xf32> to vector<8x1xf32>
    %12 = vector.broadcast %11 : vector<8x1xf32> to vector<8x16xf32>
    %13 = arith.subf %9, %12 : vector<8x16xf32>
    %14 = math.exp %13 : vector<8x16xf32>
    %cst_15 = arith.constant dense<0.000000e+00> : vector<8xf32>
    %15 = vector.multi_reduction <add>, %14, %cst_15 [1] : vector<8x16xf32> to vector<8xf32>
    %16 = vector.shape_cast %15 : vector<8xf32> to vector<8x1xf32>
    %17 = math.log %16 : vector<8x1xf32>
    %18 = arith.addf %11, %17 : vector<8x1xf32>
    %19 = tpu.iota {dimensions = array<i32: 1>} : vector<8x16xi32>
    %20 = vector.broadcast %4 : vector<8x1xi32> to vector<8x16xi32>
    %21 = arith.cmpi eq, %19, %20 : vector<8x16xi32>
    %22 = arith.extui %21 : vector<8x16xi1> to vector<8x16xi32>
    %23 = arith.sitofp %22 : vector<8x16xi32> to vector<8x16xf32>
    %24 = arith.mulf %9, %23 : vector<8x16xf32>
    %cst_16 = arith.constant dense<0.000000e+00> : vector<8xf32>
    %25 = vector.multi_reduction <add>, %24, %cst_16 [1] : vector<8x16xf32> to vector<8xf32>
    %26 = vector.shape_cast %25 : vector<8xf32> to vector<8x1xf32>
    %27 = arith.subf %18, %26 : vector<8x1xf32>
    %cst_17 = arith.constant dense<0.000000e+00> : vector<8x16xf32>
    %28 = tpu.matmul %0, %1, %cst_17 {dimension_numbers = #tpu.dot_dimension_numbers<[1], [0], [0], [1], [0, 0, 1, 1], [], []>} : vector<8x128xf32>, vector<128x16xf32>, vector<8x16xf32> -> vector<8x16xf32>
    %cst_18 = arith.constant dense<0.000000e+00> : vector<8x16xf32>
    %29 = tpu.matmul %2, %3, %cst_18 {dimension_numbers = #tpu.dot_dimension_numbers<[1], [0], [0], [1], [0, 0, 1, 1], [], []>} : vector<8x128xf32>, vector<128x16xf32>, vector<8x16xf32> -> vector<8x16xf32>
    %30 = vector.broadcast %4 : vector<8x1xi32> to vector<8x16xi32>
    %31 = vector.broadcast %5 : vector<1x16xi32> to vector<8x16xi32>
    %32 = arith.cmpi eq, %30, %31 : vector<8x16xi32>
    %cst_19 = arith.constant 2.500000e-01 : f32
    %cst_20 = arith.constant 6.250000e-02 : f32
    %33 = vector.broadcast %cst_19 : f32 to vector<8x16xf32>
    %34 = vector.broadcast %cst_20 : f32 to vector<8x16xf32>
    %35 = arith.select %32, %33, %34 : vector<8x16xi1>, vector<8x16xf32>
    %36 = arith.mulf %28, %35 : vector<8x16xf32>
    %37 = arith.mulf %29, %35 : vector<8x16xf32>
    %cst_21 = arith.constant dense<0xFF800000> : vector<8xf32>
    %38 = vector.multi_reduction <maximumf>, %36, %cst_21 [1] : vector<8x16xf32> to vector<8xf32>
    %39 = vector.shape_cast %38 : vector<8xf32> to vector<8x1xf32>
    %cst_22 = arith.constant dense<0xFF800000> : vector<8xf32>
    %40 = vector.multi_reduction <maximumf>, %37, %cst_22 [1] : vector<8x16xf32> to vector<8xf32>
    %41 = vector.shape_cast %40 : vector<8xf32> to vector<8x1xf32>
    %42 = vector.broadcast %39 : vector<8x1xf32> to vector<8x16xf32>
    %43 = arith.subf %36, %42 : vector<8x16xf32>
    %44 = math.exp %43 : vector<8x16xf32>
    %45 = vector.broadcast %41 : vector<8x1xf32> to vector<8x16xf32>
    %46 = arith.subf %37, %45 : vector<8x16xf32>
    %47 = math.exp %46 : vector<8x16xf32>
    %cst_23 = arith.constant dense<0.000000e+00> : vector<8xf32>
    %48 = vector.multi_reduction <add>, %44, %cst_23 [1] : vector<8x16xf32> to vector<8xf32>
    %49 = vector.shape_cast %48 : vector<8xf32> to vector<8x1xf32>
    %cst_24 = arith.constant dense<0.000000e+00> : vector<8xf32>
    %50 = vector.multi_reduction <add>, %47, %cst_24 [1] : vector<8x16xf32> to vector<8xf32>
    %51 = vector.shape_cast %50 : vector<8xf32> to vector<8x1xf32>
    %52 = arith.subf %37, %36 : vector<8x16xf32>
    %53 = arith.mulf %47, %52 : vector<8x16xf32>
    %cst_25 = arith.constant dense<0.000000e+00> : vector<8xf32>
    %54 = vector.multi_reduction <add>, %53, %cst_25 [1] : vector<8x16xf32> to vector<8xf32>
    %55 = vector.shape_cast %54 : vector<8xf32> to vector<8x1xf32>
    %56 = arith.divf %55, %51 : vector<8x1xf32>
    %57 = arith.subf %41, %39 : vector<8x1xf32>
    %58 = arith.subf %56, %57 : vector<8x1xf32>
    %59 = math.log %51 : vector<8x1xf32>
    %60 = math.log %49 : vector<8x1xf32>
    %61 = arith.subf %59, %60 : vector<8x1xf32>
    %62 = arith.subf %58, %61 : vector<8x1xf32>
    %63 = tpu.iota {dimensions = array<i32: 1>} : vector<8x128xi32>
    %c0_i32 = arith.constant 0 : i32
    %64 = vector.broadcast %c0_i32 : i32 to vector<8x128xi32>
    %65 = arith.cmpi eq, %63, %64 : vector<8x128xi32>
    %c1_i32 = arith.constant 1 : i32
    %66 = vector.broadcast %c1_i32 : i32 to vector<8x128xi32>
    %67 = arith.cmpi eq, %63, %66 : vector<8x128xi32>
    %cst_26 = arith.constant 0.000000e+00 : f32
    %68 = vector.shape_cast %62 : vector<8x1xf32> to vector<8x1xf32>
    %69 = vector.broadcast %68 : vector<8x1xf32> to vector<8x128xf32>
    %70 = vector.broadcast %cst_26 : f32 to vector<8x128xf32>
    %71 = arith.select %67, %69, %70 : vector<8x128xi1>, vector<8x128xf32>
    %72 = vector.shape_cast %27 : vector<8x1xf32> to vector<8x1xf32>
    %73 = vector.broadcast %72 : vector<8x1xf32> to vector<8x128xf32>
    %74 = arith.select %65, %73, %71 : vector<8x128xi1>, vector<8x128xf32>
    %c0_27 = arith.constant 0 : index
    %c0_28 = arith.constant 0 : index
    %75 = vector.load %arg8[%c0_27, %c0_28] : memref<8x128xf32, #tpu.memory_space<vmem>>, vector<8x128xf32>
    tpu.vector_store %arg8[%c0_27, %c0_28], %74 {strides = array<i32>} : memref<8x128xf32, #tpu.memory_space<vmem>>, vector<8x128xf32>,
    return
  }
  func.func @transform_0(%arg0: i32) -> (i32, i32) {
    %c0_i32 = arith.constant 0 : i32
    %c0_i32_0 = arith.constant 0 : i32
    return %arg0, %c0_i32 : i32, i32
  }
  func.func @transform_1(%arg0: i32) -> (i32, i32) {
    %c0_i32 = arith.constant 0 : i32
    %c0_i32_0 = arith.constant 0 : i32
    %c0_i32_1 = arith.constant 0 : i32
    return %c0_i32, %c0_i32_0 : i32, i32
  }
  func.func @transform_2(%arg0: i32) -> (i32, i32) {
    %c0_i32 = arith.constant 0 : i32
    %c0_i32_0 = arith.constant 0 : i32
    return %arg0, %c0_i32 : i32, i32
  }
  func.func @transform_3(%arg0: i32) -> (i32, i32) {
    %c0_i32 = arith.constant 0 : i32
    %c0_i32_0 = arith.constant 0 : i32
    %c0_i32_1 = arith.constant 0 : i32
    return %c0_i32, %c0_i32_0 : i32, i32
  }
  func.func @transform_4(%arg0: i32) -> (i32, i32) {
    %c0_i32 = arith.constant 0 : i32
    %c0_i32_0 = arith.constant 0 : i32
    return %arg0, %c0_i32 : i32, i32
  }
  func.func @transform_5(%arg0: i32) -> (i32, i32) {
    %c0_i32 = arith.constant 0 : i32
    %c0_i32_0 = arith.constant 0 : i32
    %c0_i32_1 = arith.constant 0 : i32
    return %c0_i32, %c0_i32_0 : i32, i32
  }
  func.func @transform_6(%arg0: i32) -> (i32, i32) {
    %c0_i32 = arith.constant 0 : i32
    %c0_i32_0 = arith.constant 0 : i32
    %c0_i32_1 = arith.constant 0 : i32
    return %c0_i32, %c0_i32_0 : i32, i32
  }
  func.func @transform_7(%arg0: i32) -> (i32, i32) {
    %c0_i32 = arith.constant 0 : i32
    %c0_i32_0 = arith.constant 0 : i32
    return %arg0, %c0_i32 : i32, i32
  }
}

module attributes {stable_mosaic.version = 11 : i64} {
  func.func @_criterion_kernel(%arg0: i32, %arg1: memref<8x128xf32, #tpu.memory_space<vmem>>, %arg2: memref<128x16xf32, #tpu.memory_space<vmem>>, %arg3: memref<8x128xf32, #tpu.memory_space<vmem>>, %arg4: memref<128x16xf32, #tpu.memory_space<vmem>>, %arg5: memref<8x1xi32, #tpu.memory_space<vmem>>, %arg6: memref<1x16xi32, #tpu.memory_space<vmem>>, %arg7: memref<128x16xf32, #tpu.memory_space<vmem>>, %arg8: memref<8x128xf32, #tpu.memory_space<vmem>>) attributes {dimension_semantics = [#tpu.dimension_semantics<parallel>], iteration_bounds = array<i64: 2>, scalar_prefetch = 0 : i64, scratch_operands = 0 : i64, tpu.core_type = #tpu.core_type<tc>, window_params = [{transform_indices = @transform_0, window_bounds = array<i64: 8, 128>}, {pipeline_mode = #tpu.pipeline_mode<synchronous>, transform_indices = @transform_1, window_bounds = array<i64: 128, 16>}, {transform_indices = @transform_2, window_bounds = array<i64: 8, 128>}, {pipeline_mode = #tpu.pipeline_mode<synchronous>, transform_indices = @transform_3, window_bounds = array<i64: 128, 16>}, {transform_indices = @transform_4, window_bounds = array<i64: 8, 1>}, {pipeline_mode = #tpu.pipeline_mode<synchronous>, transform_indices = @transform_5, window_bounds = array<i64: 1, 16>}, {pipeline_mode = #tpu.pipeline_mode<synchronous>, transform_indices = @transform_6, window_bounds = array<i64: 128, 16>}, {transform_indices = @transform_7, window_bounds = array<i64: 8, 128>}]} {
    %c0 = arith.constant 0 : index
    %c0_0 = arith.constant 0 : index
    %0 = vector.load %arg1[%c0, %c0_0] : memref<8x128xf32, #tpu.memory_space<vmem>>, vector<8x128xf32>
    %c0_1 = arith.constant 0 : index
    %c0_2 = arith.constant 0 : index
    %1 = vector.load %arg2[%c0_1, %c0_2] : memref<128x16xf32, #tpu.memory_space<vmem>>, vector<128x16xf32>
    %c0_3 = arith.constant 0 : index
    %c0_4 = arith.constant 0 : index
    %2 = vector.load %arg3[%c0_3, %c0_4] : memref<8x128xf32, #tpu.memory_space<vmem>>, vector<8x128xf32>
    %c0_5 = arith.constant 0 : index
    %c0_6 = arith.constant 0 : index
    %3 = vector.load %arg4[%c0_5, %c0_6] : memref<128x16xf32, #tpu.memory_space<vmem>>, vector<128x16xf32>
    %c0_7 = arith.constant 0 : index
    %c0_8 = arith.constant 0 : index
    %4 = vector.load %arg5[%c0_7, %c0_8] : memref<8x1xi32, #tpu.memory_space<vmem>>, vector<8x1xi32>
    %c0_9 = arith.constant 0 : index
    %c0_10 = arith.constant 0 : index
    %5 = vector.load %arg6[%c0_9, %c0_10] : memref<1x16xi32, #tpu.memory_space<vmem>>, vector<1x16xi32>
    %c0_11 = arith.constant 0 : index
    %c0_12 = arith.constant 0 : index
    %6 = vector.load %arg7[%c0_11, %c0_12] : memref<128x16xf32, #tpu.memory_space<vmem>>, vector<128x16xf32>
    %cst = arith.constant dense<0.000000e+00> : vector<8x16xf32>
    %7 = tpu.matmul %0, %6, %cst {dimension_numbers = #tpu.dot_dimension_numbers<[1], [0], [0], [1], [0, 0, 1, 1], [], []>} : vector<8x128xf32>, vector<128x16xf32>, vector<8x16xf32> -> vector<8x16xf32>
    %cst_13 = arith.constant 2.000000e+01 : f32
    %8 = vector.broadcast %cst_13 : f32 to vector<8x16xf32>
    %9 = arith.mulf %7, %8 : vector<8x16xf32>
    %cst_14 = arith.constant dense<0xFF800000> : vector<8xf32>
    %10 = vector.multi_reduction <maximumf>, %9, %cst_14 [1] : vector<8x16xf32> to vector<8xf32>
    %11 = vector.shape_cast %10 : vector<8xf32> to vector<8x1xf32>
    %12 = vector.broadcast %11 : vector<8x1xf32> to vector<8x16xf32>
    %13 = arith.subf %9, %12 : vector<8x16xf32>
    %14 = math.exp %13 : vector<8x16xf32>
    %cst_15 = arith.constant dense<0.000000e+00> : vector<8xf32>
    %15 = vector.multi_reduction <add>, %14, %cst_15 [1] : vector<8x16xf32> to vector<8xf32>
    %16 = vector.shape_cast %15 : vector<8xf32> to vector<8x1xf32>
    %17 = math.log %16 : vector<8x1xf32>
    %18 = arith.addf %11, %17 : vector<8x1xf32>
    %19 = tpu.iota {dimensions = array<i32: 1>} : vector<8x16xi32>
    %20 = vector.broadcast %4 : vector<8x1xi32> to vector<8x16xi32>
    %21 = arith.cmpi eq, %19, %20 : vector<8x16xi32>
    %22 = arith.extui %21 : vector<8x16xi1> to vector<8x16xi32>
    %23 = arith.sitofp %22 : vector<8x16xi32> to vector<8x16xf32>
    %24 = arith.mulf %9, %23 : vector<8x16xf32>
    %cst_16 = arith.constant dense<0.000000e+00> : vector<8xf32>
    %25 = vector.multi_reduction <add>, %24, %cst_16 [1] : vector<8x16xf32> to vector<8xf32>
    %26 = vector.shape_cast %25 : vector<8xf32> to vector<8x1xf32>
    %27 = arith.subf %18, %26 : vector<8x1xf32>
    %cst_17 = arith.constant dense<0.000000e+00> : vector<8x16xf32>
    %28 = tpu.matmul %0, %1, %cst_17 {dimension_numbers = #tpu.dot_dimension_numbers<[1], [0], [0], [1], [0, 0, 1, 1], [], []>} : vector<8x128xf32>, vector<128x16xf32>, vector<8x16xf32> -> vector<8x16xf32>
    %cst_18 = arith.constant dense<0.000000e+00> : vector<8x16xf32>
    %29 = tpu.matmul %2, %3, %cst_18 {dimension_numbers = #tpu.dot_dimension_numbers<[1], [0], [0], [1], [0, 0, 1, 1], [], []>} : vector<8x128xf32>, vector<128x16xf32>, vector<8x16xf32> -> vector<8x16xf32>
    %30 = vector.broadcast %4 : vector<8x1xi32> to vector<8x16xi32>
    %31 = vector.broadcast %5 : vector<1x16xi32> to vector<8x16xi32>
    %32 = arith.cmpi eq, %30, %31 : vector<8x16xi32>
    %cst_19 = arith.constant 2.500000e-01 : f32
    %cst_20 = arith.constant 6.250000e-02 : f32
    %33 = vector.broadcast %cst_19 : f32 to vector<8x16xf32>
    %34 = vector.broadcast %cst_20 : f32 to vector<8x16xf32>
    %35 = arith.select %32, %33, %34 : vector<8x16xi1>, vector<8x16xf32>
    %36 = arith.mulf %28, %35 : vector<8x16xf32>
    %37 = arith.mulf %29, %35 : vector<8x16xf32>
    %cst_21 = arith.constant dense<0xFF800000> : vector<8xf32>
    %38 = vector.multi_reduction <maximumf>, %36, %cst_21 [1] : vector<8x16xf32> to vector<8xf32>
    %39 = vector.shape_cast %38 : vector<8xf32> to vector<8x1xf32>
    %cst_22 = arith.constant dense<0xFF800000> : vector<8xf32>
    %40 = vector.multi_reduction <maximumf>, %37, %cst_22 [1] : vector<8x16xf32> to vector<8xf32>
    %41 = vector.shape_cast %40 : vector<8xf32> to vector<8x1xf32>
    %42 = vector.broadcast %39 : vector<8x1xf32> to vector<8x16xf32>
    %43 = arith.subf %36, %42 : vector<8x16xf32>
    %44 = math.exp %43 : vector<8x16xf32>
    %45 = vector.broadcast %41 : vector<8x1xf32> to vector<8x16xf32>
    %46 = arith.subf %37, %45 : vector<8x16xf32>
    %47 = math.exp %46 : vector<8x16xf32>
    %cst_23 = arith.constant dense<0.000000e+00> : vector<8xf32>
    %48 = vector.multi_reduction <add>, %44, %cst_23 [1] : vector<8x16xf32> to vector<8xf32>
    %49 = vector.shape_cast %48 : vector<8xf32> to vector<8x1xf32>
    %cst_24 = arith.constant dense<0.000000e+00> : vector<8xf32>
    %50 = vector.multi_reduction <add>, %47, %cst_24 [1] : vector<8x16xf32> to vector<8xf32>
    %51 = vector.shape_cast %50 : vector<8xf32> to vector<8x1xf32>
    %52 = arith.subf %37, %36 : vector<8x16xf32>
    %53 = arith.mulf %47, %52 : vector<8x16xf32>
    %cst_25 = arith.constant dense<0.000000e+00> : vector<8xf32>
    %54 = vector.multi_reduction <add>, %53, %cst_25 [1] : vector<8x16xf32> to vector<8xf32>
    %55 = vector.shape_cast %54 : vector<8xf32> to vector<8x1xf32>
    %56 = arith.divf %55, %51 : vector<8x1xf32>
    %57 = arith.subf %41, %39 : vector<8x1xf32>
    %58 = arith.subf %56, %57 : vector<8x1xf32>
    %59 = math.log %51 : vector<8x1xf32>
    %60 = math.log %49 : vector<8x1xf32>
    %61 = arith.subf %59, %60 : vector<8x1xf32>
    %62 = arith.subf %58, %61 : vector<8x1xf32>
    %63 = tpu.iota {dimensions = array<i32: 1>} : vector<8x128xi32>
    %c0_i32 = arith.constant 0 : i32
    %64 = vector.broadcast %c0_i32 : i32 to vector<8x128xi32>
    %65 = arith.cmpi eq, %63, %64 : vector<8x128xi32>
    %c1_i32 = arith.constant 1 : i32
    %66 = vector.broadcast %c1_i32 : i32 to vector<8x128xi32>
    %67 = arith.cmpi eq, %63, %66 : vector<8x128xi32>
    %cst_26 = arith.constant 0.000000e+00 : f32
    %68 = vector.shape_cast %62 : vector<8x1xf32> to vector<8x1xf32>
    %69 = vector.broadcast %68 : vector<8x1xf32> to vector<8x128xf32>
    %70 = vector.broadcast %cst_26 : f32 to vector<8x128xf32>
    %71 = arith.select %67, %69, %70 : vector<8x128xi1>, vector<8x128xf32>
    %72 = vector.shape_cast %27 : vector<8x1xf32> to vector<8x1xf32>
    %73 = vector.broadcast %72 : vector<8x1xf32> to vector<8x128xf32>
    %74 = arith.select %65, %73, %71 : vector<8x128xi1>, vector<8x128xf32>
    %c0_27 = arith.constant 0 : index
    %c0_28 = arith.constant 0 : index
    %75 = vector.load %arg8[%c0_27, %c0_28] : memref<8x128xf32, #tpu.memory_space<vmem>>, vector<8x128xf32>
    tpu.vector_store %arg8[%c0_27, %c0_28], %74 {strides = array<i32>} : memref<8x128xf32, #tpu.memory_space<vmem>>, vector<8x128xf32>,
    return
  }
  func.func @transform_0(%arg0: i32) -> (i32, i32) {
    %c0_i32 = arith.constant 0 : i32
    %c0_i32_0 = arith.constant 0 : i32
    return %arg0, %c0_i32 : i32, i32
  }
  func.func @transform_1(%arg0: i32) -> (i32, i32) {
    %c0_i32 = arith.constant 0 : i32
    %c0_i32_0 = arith.constant 0 : i32
    %c0_i32_1 = arith.constant 0 : i32
    return %c0_i32, %c0_i32_0 : i32, i32
  }
  func.func @transform_2(%arg0: i32) -> (i32, i32) {
    %c0_i32 = arith.constant 0 : i32
    %c0_i32_0 = arith.constant 0 : i32
    return %arg0, %c0_i32 : i32, i32
  }
  func.func @transform_3(%arg0: i32) -> (i32, i32) {
    %c0_i32 = arith.constant 0 : i32
    %c0_i32_0 = arith.constant 0 : i32
    %c0_i32_1 = arith.constant 0 : i32
    return %c0_i32, %c0_i32_0 : i32, i32
  }
  func.func @transform_4(%arg0: i32) -> (i32, i32) {
    %c0_i32 = arith.constant 0 : i32
    %c0_i32_0 = arith.constant 0 : i32
    return %arg0, %c0_i32 : i32, i32
  }
  func.func @transform_5(%arg0: i32) -> (i32, i32) {
    %c0_i32 = arith.constant 0 : i32
    %c0_i32_0 = arith.constant 0 : i32
    %c0_i32_1 = arith.constant 0 : i32
    return %c0_i32, %c0_i32_0 : i32, i32
  }
  func.func @transform_6(%arg0: i32) -> (i32, i32) {
    %c0_i32 = arith.constant 0 : i32
    %c0_i32_0 = arith.constant 0 : i32
    %c0_i32_1 = arith.constant 0 : i32
    return %c0_i32, %c0_i32_0 : i32, i32
  }
  func.func @transform_7(%arg0: i32) -> (i32, i32) {
    %c0_i32 = arith.constant 0 : i32
    %c0_i32_0 = arith.constant 0 : i32
    return %arg0, %c0_i32 : i32, i32
  }
}

</mosaic_0001>

<llo_original>
// kernel: _softmax_lsd_impl.1
$region0: #{_softmax_lsd_impl.1}
  #allocation0 [shape = 'u32[]', space=smem, size = 0x4, offset = 0x4, fixed_abs, tag = 'smem constant byte address 0x4 - core index']
  #allocation1 [shape = 'u32[72,128]{1,0:T(1,128)}', space=vmem, size = 0x9000, scoped, tag = 'internal scratch']
  %s0 = inlined_call_operand.vmem [shape: f32[16,128], index: 0, kind: input, shape index: {}]
  %s1 = inlined_call_operand.vmem [shape: f32[128,16], index: 1, kind: input, shape index: {}]
  %s2 = inlined_call_operand.vmem [shape: f32[16,128], index: 2, kind: input, shape index: {}]
  %s3 = inlined_call_operand.vmem [shape: f32[128,16], index: 3, kind: input, shape index: {}]
  %s4 = inlined_call_operand.vmem [shape: s32[16,1], index: 4, kind: input, shape index: {}]
  %s5 = inlined_call_operand.vmem [shape: s32[1,16], index: 5, kind: input, shape index: {}]
  %s6 = inlined_call_operand.vmem [shape: f32[128,16], index: 6, kind: input, shape index: {}]
  %s7 = inlined_call_operand.vmem [shape: f32[16,128], index: 7, kind: output, shape index: {}]
  %s8 = sld [smem:[#allocation0]]
  $region61: #{_softmax_lsd_impl.1} parent=0
    _
  %s10 = ssub.s32 1, %s8
  %s11 = scalar_select 0, %s10, %s8
  loop: start=0, step=1, limit=4
  $region2: #{_softmax_lsd_impl.1} parent=0 // loop_pre_header
    _
  $region3: #{_softmax_lsd_impl.1} parent=0 // loop_header
    %s13 = sphi 0, %s17
    %p14 = scmp.ge.s32.totalorder %s13, 4
    %s23 = sphi 0, %s25
    %s26 = sphi 0, %s23
    %s27 = sphi 0, %s26
    %s43 = sphi 0, %s27
    %s47 = sphi 0, %s47
    %s49 = sphi 0, %s47
    %s50 = sphi 0, %s49
    %s64 = sphi 0, %s50
    %s70 = sphi 0, %s72
    %s73 = sphi 0, %s70
    %s74 = sphi 0, %s73
    %s90 = sphi 0, %s74
    %s94 = sphi 0, %s94
    %s96 = sphi 0, %s94
    %s97 = sphi 0, %s96
    %s111 = sphi 0, %s97
    %s117 = sphi 0, %s119
    %s120 = sphi 0, %s117
    %s121 = sphi 0, %s120
    %s137 = sphi 0, %s121
    %s141 = sphi 0, %s141
    %s143 = sphi 0, %s141
    %s144 = sphi 0, %s143
    %s158 = sphi 0, %s144
    %s162 = sphi 0, %s162
    %s164 = sphi 0, %s162
    %s165 = sphi 0, %s164
    %s179 = sphi 0, %s165
    %s185 = sphi 0, %s187
    %s188 = sphi 0, %s185
    %s189 = sphi 0, %s188
    %s205 = sphi 0, %s189
  $region4: #{_softmax_lsd_impl.1} parent=0 // loop_header_branch
    %16 = sbr.rel (%p14) target = $region8
  $region5: #{_softmax_lsd_impl.1} parent=0 // loop_body
    %s18 = ssub.s32 %s13, 1
    %s19 = ssub.s32 %s13, 2
    %s20 = sadd.s32 %s13, 1
    %s21 = ssub.s32 %s13, %s20
    %p22 = scmp.eq.s32.totalorder %s21, 0
    %s24 = sadd.s32 %s23, 1
    %s25 = scalar_select %p22, %s23, %s24
    %p28 = pneg %p22
    %p29 = scmp.eq.s32.totalorder %s13, 1
    %p30 = por %p28, %p29
    %p31 = scmp.ne.s32.totalorder %s23, %s26
    %p32 = scmp.eq.s32.totalorder %s13, 0
    %p33 = por %p31, %p32
    %p34 = scmp.ne.s32.totalorder %s23, %s26
    %p35 = scmp.eq.s32.totalorder %s18, 1
    %p36 = por %p34, %p35
    %p37 = scmp.ne.s32.totalorder %s26, %s27
    %p38 = scmp.eq.s32.totalorder %s18, 0
    %p39 = por %p37, %p38
    %p40 = scmp.ne.s32.totalorder %s26, %s27
    %p41 = scmp.eq.s32.totalorder %s19, 1
    %p42 = por %p40, %p41
    %p44 = scmp.ne.s32.totalorder %s27, %s43
    %p45 = scmp.eq.s32.totalorder %s19, 0
    %p46 = por %p44, %p45
    %s48 = sadd.s32 %s47, 1
    %p51 = scmp.eq.s32.totalorder %s13, 1
    %p52 = scmp.ne.s32.totalorder %s47, %s49
    %p53 = scmp.eq.s32.totalorder %s13, 0
    %p54 = por %p52, %p53
    %p55 = scmp.ne.s32.totalorder %s47, %s49
    %p56 = scmp.eq.s32.totalorder %s18, 1
    %p57 = por %p55, %p56
    %p58 = scmp.ne.s32.totalorder %s49, %s50
    %p59 = scmp.eq.s32.totalorder %s18, 0
    %p60 = por %p58, %p59
    %p61 = scmp.ne.s32.totalorder %s49, %s50
    %p62 = scmp.eq.s32.totalorder %s19, 1
    %p63 = por %p61, %p62
    %p65 = scmp.ne.s32.totalorder %s50, %s64
    %p66 = scmp.eq.s32.totalorder %s19, 0
    %p67 = por %p65, %p66
    %s68 = ssub.s32 %s13, %s20
    %p69 = scmp.eq.s32.totalorder %s68, 0
    %s71 = sadd.s32 %s70, 1
    %s72 = scalar_select %p69, %s70, %s71
    %p75 = pneg %p69
    %p76 = scmp.eq.s32.totalorder %s13, 1
    %p77 = por %p75, %p76
    %p78 = scmp.ne.s32.totalorder %s70, %s73
    %p79 = scmp.eq.s32.totalorder %s13, 0
    %p80 = por %p78, %p79
    %p81 = scmp.ne.s32.totalorder %s70, %s73
    %p82 = scmp.eq.s32.totalorder %s18, 1
    %p83 = por %p81, %p82
    %p84 = scmp.ne.s32.totalorder %s73, %s74
    %p85 = scmp.eq.s32.totalorder %s18, 0
    %p86 = por %p84, %p85
    %p87 = scmp.ne.s32.totalorder %s73, %s74
    %p88 = scmp.eq.s32.totalorder %s19, 1
    %p89 = por %p87, %p88
    %p91 = scmp.ne.s32.totalorder %s74, %s90
    %p92 = scmp.eq.s32.totalorder %s19, 0
    %p93 = por %p91, %p92
    %s95 = sadd.s32 %s94, 1
    %p98 = scmp.eq.s32.totalorder %s13, 1
    %p99 = scmp.ne.s32.totalorder %s94, %s96
    %p100 = scmp.eq.s32.totalorder %s13, 0
    %p101 = por %p99, %p100
    %p102 = scmp.ne.s32.totalorder %s94, %s96
    %p103 = scmp.eq.s32.totalorder %s18, 1
    %p104 = por %p102, %p103
    %p105 = scmp.ne.s32.totalorder %s96, %s97
    %p106 = scmp.eq.s32.totalorder %s18, 0
    %p107 = por %p105, %p106
    %p108 = scmp.ne.s32.totalorder %s96, %s97
    %p109 = scmp.eq.s32.totalorder %s19, 1
    %p110 = por %p108, %p109
    %p112 = scmp.ne.s32.totalorder %s97, %s111
    %p113 = scmp.eq.s32.totalorder %s19, 0
    %p114 = por %p112, %p113
    %s115 = ssub.s32 %s13, %s20
    %p116 = scmp.eq.s32.totalorder %s115, 0
    %s118 = sadd.s32 %s117, 1
    %s119 = scalar_select %p116, %s117, %s118
    %p122 = pneg %p116
    %p123 = scmp.eq.s32.totalorder %s13, 1
    %p124 = por %p122, %p123
    %p125 = scmp.ne.s32.totalorder %s117, %s120
    %p126 = scmp.eq.s32.totalorder %s13, 0
    %p127 = por %p125, %p126
    %p128 = scmp.ne.s32.totalorder %s117, %s120
    %p129 = scmp.eq.s32.totalorder %s18, 1
    %p130 = por %p128, %p129
    %p131 = scmp.ne.s32.totalorder %s120, %s121
    %p132 = scmp.eq.s32.totalorder %s18, 0
    %p133 = por %p131, %p132
    %p134 = scmp.ne.s32.totalorder %s120, %s121
    %p135 = scmp.eq.s32.totalorder %s19, 1
    %p136 = por %p134, %p135
    %p138 = scmp.ne.s32.totalorder %s121, %s137
    %p139 = scmp.eq.s32.totalorder %s19, 0
    %p140 = por %p138, %p139
    %s142 = sadd.s32 %s141, 1
    %p145 = scmp.eq.s32.totalorder %s13, 1
    %p146 = scmp.ne.s32.totalorder %s141, %s143
    %p147 = scmp.eq.s32.totalorder %s13, 0
    %p148 = por %p146, %p147
    %p149 = scmp.ne.s32.totalorder %s141, %s143
    %p150 = scmp.eq.s32.totalorder %s18, 1
    %p151 = por %p149, %p150
    %p152 = scmp.ne.s32.totalorder %s143, %s144
    %p153 = scmp.eq.s32.totalorder %s18, 0
    %p154 = por %p152, %p153
    %p155 = scmp.ne.s32.totalorder %s143, %s144
    %p156 = scmp.eq.s32.totalorder %s19, 1
    %p157 = por %p155, %p156
    %p159 = scmp.ne.s32.totalorder %s144, %s158
    %p160 = scmp.eq.s32.totalorder %s19, 0
    %p161 = por %p159, %p160
    %s163 = sadd.s32 %s162, 1
    %p166 = scmp.eq.s32.totalorder %s13, 1
    %p167 = scmp.ne.s32.totalorder %s162, %s164
    %p168 = scmp.eq.s32.totalorder %s13, 0
    %p169 = por %p167, %p168
    %p170 = scmp.ne.s32.totalorder %s162, %s164
    %p171 = scmp.eq.s32.totalorder %s18, 1
    %p172 = por %p170, %p171
    %p173 = scmp.ne.s32.totalorder %s164, %s165
    %p174 = scmp.eq.s32.totalorder %s18, 0
    %p175 = por %p173, %p174
    %p176 = scmp.ne.s32.totalorder %s164, %s165
    %p177 = scmp.eq.s32.totalorder %s19, 1
    %p178 = por %p176, %p177
    %p180 = scmp.ne.s32.totalorder %s165, %s179
    %p181 = scmp.eq.s32.totalorder %s19, 0
    %p182 = por %p180, %p181
    %s183 = ssub.s32 %s13, %s20
    %p184 = scmp.eq.s32.totalorder %s183, 0
    %s186 = sadd.s32 %s185, 1
    %s187 = scalar_select %p184, %s185, %s186
    %p190 = pneg %p184
    %p191 = scmp.eq.s32.totalorder %s13, 1
    %p192 = por %p190, %p191
    %p193 = scmp.ne.s32.totalorder %s185, %s188
    %p194 = scmp.eq.s32.totalorder %s13, 0
    %p195 = por %p193, %p194
    %p196 = scmp.ne.s32.totalorder %s185, %s188
    %p197 = scmp.eq.s32.totalorder %s18, 1
    %p198 = por %p196, %p197
    %p199 = scmp.ne.s32.totalorder %s188, %s189
    %p200 = scmp.eq.s32.totalorder %s18, 0
    %p201 = por %p199, %p200
    %p202 = scmp.ne.s32.totalorder %s188, %s189
    %p203 = scmp.eq.s32.totalorder %s19, 1
    %p204 = por %p202, %p203
    %p206 = scmp.ne.s32.totalorder %s189, %s205
    %p207 = scmp.eq.s32.totalorder %s19, 0
    %p208 = por %p206, %p207
    %p209 = scmp.le.s32.totalorder 1, %s13
    %p210 = scmp.lt.s32.totalorder %s13, 3
    %p211 = pnand %p209, %p210
    %p212 = pneg %p211
    // Predicated region
    $region9: #{_softmax_lsd_impl.1} parent=5 // pred_check
      _
    $region10: #{_softmax_lsd_impl.1} parent=5 // pred_check_branch
      %214 = sbr.rel (%p211) target = $region12
    $region11: #{_softmax_lsd_impl.1} parent=5 // pred_region
      %s215 = ssub.s32 %s13, 1
      // Predicated region
      $region13: #{_softmax_lsd_impl.1} parent=11 // pred_check
        %p216 = pneg %p60
      $region14: #{_softmax_lsd_impl.1} parent=11 // pred_check_branch
        %218 = sbr.rel (%p216) target = $region16
      $region15: #{_softmax_lsd_impl.1} parent=11 // pred_region
        _
      $region16: #{_softmax_lsd_impl.1} parent=11 // pred_fallthru
        _
      // Predicated region
      $region17: #{_softmax_lsd_impl.1} parent=11 // pred_check
        %p219 = pneg %p107
      $region18: #{_softmax_lsd_impl.1} parent=11 // pred_check_branch
        %221 = sbr.rel (%p219) target = $region20
      $region19: #{_softmax_lsd_impl.1} parent=11 // pred_region
        _
      $region20: #{_softmax_lsd_impl.1} parent=11 // pred_fallthru
        _
      // Predicated region
      $region21: #{_softmax_lsd_impl.1} parent=11 // pred_check
        %p222 = pneg %p154
      $region22: #{_softmax_lsd_impl.1} parent=11 // pred_check_branch
        %224 = sbr.rel (%p222) target = $region24
      $region23: #{_softmax_lsd_impl.1} parent=11 // pred_region
        _
      $region24: #{_softmax_lsd_impl.1} parent=11 // pred_fallthru
        _
      // Predicated region
      $region25: #{_softmax_lsd_impl.1} parent=11 // pred_check
        %p225 = pneg %p175
      $region26: #{_softmax_lsd_impl.1} parent=11 // pred_check_branch
        %227 = sbr.rel (%p225) target = $region28
      $region27: #{_softmax_lsd_impl.1} parent=11 // pred_region
        _
      $region28: #{_softmax_lsd_impl.1} parent=11 // pred_fallthru
        _
    $region12: #{_softmax_lsd_impl.1} parent=5 // pred_fallthru
      _
    %p228 = scmp.lt.s32.totalorder %s13, 2
    // Predicated region
    $region29: #{_softmax_lsd_impl.1} parent=5 // pred_check
      %p229 = pneg %p228
    $region30: #{_softmax_lsd_impl.1} parent=5 // pred_check_branch
      %231 = sbr.rel (%p229) target = $region32
    $region31: #{_softmax_lsd_impl.1} parent=5 // pred_region
      // Predicated region
      $region33: #{_softmax_lsd_impl.1} parent=31 // pred_check
        %p232 = pneg %p33
      $region34: #{_softmax_lsd_impl.1} parent=31 // pred_check_branch
        %234 = sbr.rel (%p232) target = $region36
      $region35: #{_softmax_lsd_impl.1} parent=31 // pred_region
        %p235 = scmp.lt.s32.totalorder %s13, 1
        %s236 = scalar_select %p235, %s13, 1
        %s237 = smul.addr %s236, 8
        %s238 = scalar_lea.vmem %s0, %s237
      $region36: #{_softmax_lsd_impl.1} parent=31 // pred_fallthru
        _
      // Predicated region
      $region37: #{_softmax_lsd_impl.1} parent=31 // pred_check
        %p239 = pneg %p80
      $region38: #{_softmax_lsd_impl.1} parent=31 // pred_check_branch
        %241 = sbr.rel (%p239) target = $region40
      $region39: #{_softmax_lsd_impl.1} parent=31 // pred_region
        %p242 = scmp.lt.s32.totalorder %s13, 1
        %s243 = scalar_select %p242, %s13, 1
        %s244 = smul.addr %s243, 8
        %s245 = scalar_lea.vmem %s2, %s244
      $region40: #{_softmax_lsd_impl.1} parent=31 // pred_fallthru
        _
      // Predicated region
      $region41: #{_softmax_lsd_impl.1} parent=31 // pred_check
        %p246 = pneg %p127
      $region42: #{_softmax_lsd_impl.1} parent=31 // pred_check_branch
        %248 = sbr.rel (%p246) target = $region44
      $region43: #{_softmax_lsd_impl.1} parent=31 // pred_region
        %p249 = scmp.lt.s32.totalorder %s13, 1
        %s250 = scalar_select %p249, %s13, 1
        %s251 = smul.addr %s250, 8
        %s252 = scalar_lea.vmem %s4, %s251
      $region44: #{_softmax_lsd_impl.1} parent=31 // pred_fallthru
        _
    $region32: #{_softmax_lsd_impl.1} parent=5 // pred_fallthru
      _
    %p253 = scmp.le.s32.totalorder 1, %s13
    %p254 = scmp.lt.s32.totalorder %s13, 3
    %p255 = pnand %p253, %p254
    %p256 = pneg %p255
    // Predicated region
    $region45: #{_softmax_lsd_impl.1} parent=5 // pred_check
      _
    $region46: #{_softmax_lsd_impl.1} parent=5 // pred_check_branch
      %258 = sbr.rel (%p255) target = $region48
    $region47: #{_softmax_lsd_impl.1} parent=5 // pred_region
      %s259 = ssub.s32 %s13, 1
      %p260 = scmp.lt.s32.totalorder %s18, 1
      %s261 = scalar_select %p260, %s18, 1
      %s262 = smul.addr %s261, 8
      %s263 = scalar_lea.vmem %s0, %s262
      %p264 = pneg %p39
      %p265 = pneg %p36
      %p266 = pneg %p60
      %p267 = pneg %p57
      %p268 = scmp.lt.s32.totalorder %s18, 1
      %s269 = scalar_select %p268, %s18, 1
      %s270 = smul.addr %s269, 8
      %s271 = scalar_lea.vmem %s2, %s270
      %p272 = pneg %p86
      %p273 = pneg %p83
      %p274 = pneg %p107
      %p275 = pneg %p104
      %p276 = scmp.lt.s32.totalorder %s18, 1
      %s277 = scalar_select %p276, %s18, 1
      %s278 = smul.addr %s277, 8
      %s279 = scalar_lea.vmem %s4, %s278
      %p280 = pneg %p133
      %p281 = pneg %p130
      %p282 = pneg %p154
      %p283 = pneg %p151
      %p284 = pneg %p175
      %p285 = pneg %p172
      %p286 = pneg %p201
      %p287 = pneg %p198
      %p288 = scmp.lt.s32.totalorder %s18, 1
      %s289 = scalar_select %p288, %s18, 1
      %s290 = smul.addr %s289, 8
      %s291 = scalar_lea.vmem %s7, %s290
      %p292 = scmp.lt.s32.totalorder %s18, 1
      %s293 = scalar_select %p292, %s18, 1
      %s294 = smul.addr %s293, 8
      %s295 = scalar_lea.vmem %s0, %s294
      %p296 = scmp.lt.s32.totalorder %s18, 1
      %s297 = scalar_select %p296, %s18, 1
      %s298 = smul.addr %s297, 8
      %s299 = scalar_lea.vmem %s2, %s298
      %p300 = scmp.lt.s32.totalorder %s18, 1
      %s301 = scalar_select %p300, %s18, 1
      %s302 = smul.addr %s301, 8
      %s303 = scalar_lea.vmem %s4, %s302
      %p304 = scmp.lt.s32.totalorder %s18, 1
      %s305 = scalar_select %p304, %s18, 1
      %s306 = smul.addr %s305, 8
      %s307 = scalar_lea.vmem %s7, %s306
      %v308 = vld [vmem:[%s295] sm:$0xff]
      %v309 = vld [vmem:[%s1] sm:$0xff]
      %v310 = vld [vmem:[%s1 + $0x8] sm:$0xff]
      %v311 = vld [vmem:[%s1 + $0x10] sm:$0xff]
      %v312 = vld [vmem:[%s1 + $0x18] sm:$0xff]
      %v313 = vld [vmem:[%s1 + $0x20] sm:$0xff]
      %v314 = vld [vmem:[%s1 + $0x28] sm:$0xff]
      %v315 = vld [vmem:[%s1 + $0x30] sm:$0xff]
      %v316 = vld [vmem:[%s1 + $0x38] sm:$0xff]
      %v317 = vld [vmem:[%s1 + $0x40] sm:$0xff]
      %v318 = vld [vmem:[%s1 + $0x48] sm:$0xff]
      %v319 = vld [vmem:[%s1 + $0x50] sm:$0xff]
      %v320 = vld [vmem:[%s1 + $0x58] sm:$0xff]
      %v321 = vld [vmem:[%s1 + $0x60] sm:$0xff]
      %v322 = vld [vmem:[%s1 + $0x68] sm:$0xff]
      %v323 = vld [vmem:[%s1 + $0x70] sm:$0xff]
      %v324 = vld [vmem:[%s1 + $0x78] sm:$0xff]
      %v325 = vld [vmem:[%s299] sm:$0xff]
      %v326 = vld [vmem:[%s3] sm:$0xff]
      %v327 = vld [vmem:[%s3 + $0x8] sm:$0xff]
      %v328 = vld [vmem:[%s3 + $0x10] sm:$0xff]
      %v329 = vld [vmem:[%s3 + $0x18] sm:$0xff]
      %v330 = vld [vmem:[%s3 + $0x20] sm:$0xff]
      %v331 = vld [vmem:[%s3 + $0x28] sm:$0xff]
      %v332 = vld [vmem:[%s3 + $0x30] sm:$0xff]
      %v333 = vld [vmem:[%s3 + $0x38] sm:$0xff]
      %v334 = vld [vmem:[%s3 + $0x40] sm:$0xff]
      %v335 = vld [vmem:[%s3 + $0x48] sm:$0xff]
      %v336 = vld [vmem:[%s3 + $0x50] sm:$0xff]
      %v337 = vld [vmem:[%s3 + $0x58] sm:$0xff]
      %v338 = vld [vmem:[%s3 + $0x60] sm:$0xff]
      %v339 = vld [vmem:[%s3 + $0x68] sm:$0xff]
      %v340 = vld [vmem:[%s3 + $0x70] sm:$0xff]
      %v341 = vld [vmem:[%s3 + $0x78] sm:$0xff]
      %v342 = vld [vmem:[%s303] sm:$0xff]
      %v343 = vld [vmem:[%s5] sm:$0x1]
      %v344 = vld [vmem:[%s6] sm:$0xff]
      %v345 = vld [vmem:[%s6 + $0x8] sm:$0xff]
      %v346 = vld [vmem:[%s6 + $0x10] sm:$0xff]
      %v347 = vld [vmem:[%s6 + $0x18] sm:$0xff]
      %v348 = vld [vmem:[%s6 + $0x20] sm:$0xff]
      %v349 = vld [vmem:[%s6 + $0x28] sm:$0xff]
      %v350 = vld [vmem:[%s6 + $0x30] sm:$0xff]
      %v351 = vld [vmem:[%s6 + $0x38] sm:$0xff]
      %v352 = vld [vmem:[%s6 + $0x40] sm:$0xff]
      %v353 = vld [vmem:[%s6 + $0x48] sm:$0xff]
      %v354 = vld [vmem:[%s6 + $0x50] sm:$0xff]
      %v355 = vld [vmem:[%s6 + $0x58] sm:$0xff]
      %v356 = vld [vmem:[%s6 + $0x60] sm:$0xff]
      %v357 = vld [vmem:[%s6 + $0x68] sm:$0xff]
      %v358 = vld [vmem:[%s6 + $0x70] sm:$0xff]
      %v359 = vld [vmem:[%s6 + $0x78] sm:$0xff]
      %360 = vmatpush.msra.mxu0 %v359
      %361 = vmatpush.msra.mxu0 %v358
      %362 = vmatpush.msra.mxu0 %v357
      %363 = vmatpush.msra.mxu0 %v356
      %364 = vmatpush.msra.mxu0 %v355
      %365 = vmatpush.msra.mxu0 %v354
      %366 = vmatpush.msra.mxu0 %v353
      %367 = vmatpush.msra.mxu0 %v352
      %368 = vmatpush.msra.mxu0 %v351
      %369 = vmatpush.msra.mxu0 %v350
      %370 = vmatpush.msra.mxu0 %v349
      %371 = vmatpush.msra.mxu0 %v348
      %372 = vmatpush.msra.mxu0 %v347
      %373 = vmatpush.msra.mxu0 %v346
      %374 = vmatpush.msra.mxu0 %v345
      %375 = vmatpush.msra.mxu0 %v344
      %376 = vmatmul.f32.gmra.mxu0 %v308
      %v377 = vpop.f32.mrf.mxu0
      %v378 = vadd.f32 0.0, %v377
      %379 = vdwg.mxu0
      %v380 = vmul.f32 %v378, 20.0
      %vm381 = vcmask 130048
      %v382 = vsel %vm381, %v380, -inf
      %383 = vmax.xlane.f32.xlu0 %v382
      %v384 = vpop.xlane.xlu0 %383
      %v385 = vsub.f32 %v380, %v384
      %v386 = vmul.f32 %v385, 1.442695
      %v387 = vpow.pop %v386
      %v388 = vsel %vm381, %v387, 0.0
      %389 = vadd.xlane.f32.xlu0 %v388
      %v390 = vpop.xlane.xlu0 %389
      %v391 = vlog2.pop %v390
      %v392 = vmul.f32 %v391, 0.6931472
      %v393 = vadd.f32 %v384, %v392
      %v394 = vlaneseq
      %v395 = vand.u32 %v394, 127
      %396 = vset.pattern.permute.xlu0 0
      %397 = vperm.xlu0 %396, %v342
      %v398 = vpop.permute.xlu0 %397
      %vm399 = vcmp.eq.s32.totalorder %v395, %v398
      %v400 = vsel %vm399, 1, 0
      %v401 = vcvt.s32.f32 %v400
      %v402 = vmul.f32 %v380, %v401
      %v403 = vsel %vm381, %v402, 0.0
      %404 = vadd.xlane.f32.xlu0 %v403
      %v405 = vpop.xlane.xlu0 %404
      %v406 = vsub.f32 %v393, %v405
      %407 = vmatpush.msra.mxu0 %v324
      %408 = vmatpush.msra.mxu0 %v323
      %409 = vmatpush.msra.mxu0 %v322
      %410 = vmatpush.msra.mxu0 %v321
      %411 = vmatpush.msra.mxu0 %v320
      %412 = vmatpush.msra.mxu0 %v319
      %413 = vmatpush.msra.mxu0 %v318
      %414 = vmatpush.msra.mxu0 %v317
      %415 = vmatpush.msra.mxu0 %v316
      %416 = vmatpush.msra.mxu0 %v315
      %417 = vmatpush.msra.mxu0 %v314
      %418 = vmatpush.msra.mxu0 %v313
      %419 = vmatpush.msra.mxu0 %v312
      %420 = vmatpush.msra.mxu0 %v311
      %421 = vmatpush.msra.mxu0 %v310
      %422 = vmatpush.msra.mxu0 %v309
      %423 = vmatmul.f32.gmra.mxu0 %v308
      %v424 = vpop.f32.mrf.mxu0
      %v425 = vadd.f32 0.0, %v424
      %426 = vdwg.mxu0
      %427 = vmatpush.msra.mxu0 %v341
      %428 = vmatpush.msra.mxu0 %v340
      %429 = vmatpush.msra.mxu0 %v339
      %430 = vmatpush.msra.mxu0 %v338
      %431 = vmatpush.msra.mxu0 %v337
      %432 = vmatpush.msra.mxu0 %v336
      %433 = vmatpush.msra.mxu0 %v335
      %434 = vmatpush.msra.mxu0 %v334
      %435 = vmatpush.msra.mxu0 %v333
      %436 = vmatpush.msra.mxu0 %v332
      %437 = vmatpush.msra.mxu0 %v331
      %438 = vmatpush.msra.mxu0 %v330
      %439 = vmatpush.msra.mxu0 %v329
      %440 = vmatpush.msra.mxu0 %v328
      %441 = vmatpush.msra.mxu0 %v327
      %442 = vmatpush.msra.mxu0 %v326
      %443 = vmatmul.f32.gmra.mxu0 %v325
      %v444 = vpop.f32.mrf.mxu0
      %v445 = vadd.f32 0.0, %v444
      %446 = vdwg.mxu0
      %v447 = vperm.slane %v343, 0
      %vm448 = vcmp.eq.s32.totalorder %v398, %v447
      %v449 = vsel %vm448, 0.25, 0.0625
      %v450 = vmul.f32 %v425, %v449
      %v451 = vmul.f32 %v445, %v449
      %v452 = vsel %vm381, %v450, -inf
      %453 = vmax.xlane.f32.xlu0 %v452
      %v454 = vpop.xlane.xlu0 %453
      %v455 = vsel %vm381, %v451, -inf
      %456 = vmax.xlane.f32.xlu0 %v455
      %v457 = vpop.xlane.xlu0 %456
      %v458 = vsub.f32 %v450, %v454
      %v459 = vmul.f32 %v458, 1.442695
      %v460 = vpow.pop %v459
      %v461 = vsub.f32 %v451, %v457
      %v462 = vmul.f32 %v461, 1.442695
      %v463 = vpow.pop %v462
      %v464 = vsel %vm381, %v460, 0.0
      %465 = vadd.xlane.f32.xlu0 %v464
      %v466 = vpop.xlane.xlu0 %465
      %v467 = vsel %vm381, %v463, 0.0
      %468 = vadd.xlane.f32.xlu0 %v467
      %v469 = vpop.xlane.xlu0 %468
      %v470 = vsub.f32 %v451, %v450
      %v471 = vmul.f32 %v463, %v470
      %v472 = vsel %vm381, %v471, 0.0
      %473 = vadd.xlane.f32.xlu0 %v472
      %v474 = vpop.xlane.xlu0 %473
      %v475 = vrcp.pop %v469
      %v476 = vmul.f32 %v469, %v475
      %v477 = vsub.f32 1.0, %v476
      %v478 = vmul.f32 %v475, %v477
      %v479 = vadd.f32 %v475, %v478
      %vm480 = vweird.f32 %v469
      %vm481 = vweird.f32 %v475
      %vm482 = vmor %vm480, %vm481
      %v483 = vsel %vm482, %v475, %v479
      %v484 = vand.u32 2147483647, %v469
      %vm485 = vcmp.eq.f32.partialorder %v484, 8.507059e+37
      %v486 = vand.u32 %v469, 2147483648
      %v487 = vor.u32 1.1754944e-38, %v486
      %v488 = vsel %vm485, %v487, %v483
      %v489 = vmul.f32 %v474, %v488
      %v490 = vsub.f32 %v457, %v454
      %v491 = vsub.f32 %v489, %v490
      %v492 = vlog2.pop %v469
      %v493 = vmul.f32 %v492, 0.6931472
      %v494 = vlog2.pop %v466
      %v495 = vmul.f32 %v494, 0.6931472
      %v496 = vsub.f32 %v493, %v495
      %v497 = vsub.f32 %v491, %v496
      %vm498 = vcmp.eq.s32.totalorder %v395, 0
      %vm499 = vcmp.eq.s32.totalorder %v395, 1
      %v500 = vsel %vm499, %v497, 0.0
      %v501 = vsel %vm498, %v406, %v500
      %502 = vst [vmem:[%s307] sm:$0xff] %v501
      %p503 = scmp.lt.s32.totalorder %s18, 1
      %s504 = scalar_select %p503, %s18, 1
      %s505 = smul.addr %s504, 8
      %s506 = scalar_lea.vmem %s7, %s505
      // Predicated region
      $region49: #{_softmax_lsd_impl.1} parent=47 // pred_check
        %p507 = pneg %p198
      $region50: #{_softmax_lsd_impl.1} parent=47 // pred_check_branch
        %509 = sbr.rel (%p507) target = $region52
      $region51: #{_softmax_lsd_impl.1} parent=47 // pred_region
        _
      $region52: #{_softmax_lsd_impl.1} parent=47 // pred_fallthru
        _
    $region48: #{_softmax_lsd_impl.1} parent=5 // pred_fallthru
      _
    %p510 = scmp.le.s32.totalorder 2, %s13
    // Predicated region
    $region53: #{_softmax_lsd_impl.1} parent=5 // pred_check
      %p511 = pneg %p510
    $region54: #{_softmax_lsd_impl.1} parent=5 // pred_check_branch
      %513 = sbr.rel (%p511) target = $region56
    $region55: #{_softmax_lsd_impl.1} parent=5 // pred_region
      %s514 = ssub.s32 %s13, 2
      // Predicated region
      $region57: #{_softmax_lsd_impl.1} parent=55 // pred_check
        %p515 = pneg %p204
      $region58: #{_softmax_lsd_impl.1} parent=55 // pred_check_branch
        %517 = sbr.rel (%p515) target = $region60
      $region59: #{_softmax_lsd_impl.1} parent=55 // pred_region
        %p518 = scmp.lt.s32.totalorder %s19, 1
        %s519 = scalar_select %p518, %s19, 1
        %s520 = smul.addr %s519, 8
        %s521 = scalar_lea.vmem %s7, %s520
      $region60: #{_softmax_lsd_impl.1} parent=55 // pred_fallthru
        _
    $region56: #{_softmax_lsd_impl.1} parent=5 // pred_fallthru
      _
  $region6: #{_softmax_lsd_impl.1} parent=0 // loop_footer
    %s17 = sadd.s32 1, %s13
  $region7: #{_softmax_lsd_impl.1} parent=0 // loop_footer_branch
    %12 = sbr.rel target = $region3
  $region8: #{_softmax_lsd_impl.1} parent=0 // loop_exit
    _

// kernel: _softmax_lsd_impl.1
$region0: #{_softmax_lsd_impl.1}
  #allocation0 [shape = 'u32[]', space=smem, size = 0x4, offset = 0x4, fixed_abs, tag = 'smem constant byte address 0x4 - core index']
  #allocation1 [shape = 'u32[72,128]{1,0:T(1,128)}', space=vmem, size = 0x9000, scoped, tag = 'internal scratch']
  %s0 = inlined_call_operand.vmem [shape: f32[16,128], index: 0, kind: input, shape index: {}]
  %s1 = inlined_call_operand.vmem [shape: f32[128,16], index: 1, kind: input, shape index: {}]
  %s2 = inlined_call_operand.vmem [shape: f32[16,128], index: 2, kind: input, shape index: {}]
  %s3 = inlined_call_operand.vmem [shape: f32[128,16], index: 3, kind: input, shape index: {}]
  %s4 = inlined_call_operand.vmem [shape: s32[16,1], index: 4, kind: input, shape index: {}]
  %s5 = inlined_call_operand.vmem [shape: s32[1,16], index: 5, kind: input, shape index: {}]
  %s6 = inlined_call_operand.vmem [shape: f32[128,16], index: 6, kind: input, shape index: {}]
  %s7 = inlined_call_operand.vmem [shape: f32[16,128], index: 7, kind: output, shape index: {}]
  %s8 = sld [smem:[#allocation0]]
  $region61: #{_softmax_lsd_impl.1} parent=0
    _
  %s10 = ssub.s32 1, %s8
  %s11 = scalar_select 0, %s10, %s8
  loop: start=0, step=1, limit=4
  $region2: #{_softmax_lsd_impl.1} parent=0 // loop_pre_header
    _
  $region3: #{_softmax_lsd_impl.1} parent=0 // loop_header
    %s13 = sphi 0, %s17
    %p14 = scmp.ge.s32.totalorder %s13, 4
    %s23 = sphi 0, %s25
    %s26 = sphi 0, %s23
    %s27 = sphi 0, %s26
    %s43 = sphi 0, %s27
    %s47 = sphi 0, %s47
    %s49 = sphi 0, %s47
    %s50 = sphi 0, %s49
    %s64 = sphi 0, %s50
    %s70 = sphi 0, %s72
    %s73 = sphi 0, %s70
    %s74 = sphi 0, %s73
    %s90 = sphi 0, %s74
    %s94 = sphi 0, %s94
    %s96 = sphi 0, %s94
    %s97 = sphi 0, %s96
    %s111 = sphi 0, %s97
    %s117 = sphi 0, %s119
    %s120 = sphi 0, %s117
    %s121 = sphi 0, %s120
    %s137 = sphi 0, %s121
    %s141 = sphi 0, %s141
    %s143 = sphi 0, %s141
    %s144 = sphi 0, %s143
    %s158 = sphi 0, %s144
    %s162 = sphi 0, %s162
    %s164 = sphi 0, %s162
    %s165 = sphi 0, %s164
    %s179 = sphi 0, %s165
    %s185 = sphi 0, %s187
    %s188 = sphi 0, %s185
    %s189 = sphi 0, %s188
    %s205 = sphi 0, %s189
  $region4: #{_softmax_lsd_impl.1} parent=0 // loop_header_branch
    %16 = sbr.rel (%p14) target = $region8
  $region5: #{_softmax_lsd_impl.1} parent=0 // loop_body
    %s18 = ssub.s32 %s13, 1
    %s19 = ssub.s32 %s13, 2
    %s20 = sadd.s32 %s13, 1
    %s21 = ssub.s32 %s13, %s20
    %p22 = scmp.eq.s32.totalorder %s21, 0
    %s24 = sadd.s32 %s23, 1
    %s25 = scalar_select %p22, %s23, %s24
    %p28 = pneg %p22
    %p29 = scmp.eq.s32.totalorder %s13, 1
    %p30 = por %p28, %p29
    %p31 = scmp.ne.s32.totalorder %s23, %s26
    %p32 = scmp.eq.s32.totalorder %s13, 0
    %p33 = por %p31, %p32
    %p34 = scmp.ne.s32.totalorder %s23, %s26
    %p35 = scmp.eq.s32.totalorder %s18, 1
    %p36 = por %p34, %p35
    %p37 = scmp.ne.s32.totalorder %s26, %s27
    %p38 = scmp.eq.s32.totalorder %s18, 0
    %p39 = por %p37, %p38
    %p40 = scmp.ne.s32.totalorder %s26, %s27
    %p41 = scmp.eq.s32.totalorder %s19, 1
    %p42 = por %p40, %p41
    %p44 = scmp.ne.s32.totalorder %s27, %s43
    %p45 = scmp.eq.s32.totalorder %s19, 0
    %p46 = por %p44, %p45
    %s48 = sadd.s32 %s47, 1
    %p51 = scmp.eq.s32.totalorder %s13, 1
    %p52 = scmp.ne.s32.totalorder %s47, %s49
    %p53 = scmp.eq.s32.totalorder %s13, 0
    %p54 = por %p52, %p53
    %p55 = scmp.ne.s32.totalorder %s47, %s49
    %p56 = scmp.eq.s32.totalorder %s18, 1
    %p57 = por %p55, %p56
    %p58 = scmp.ne.s32.totalorder %s49, %s50
    %p59 = scmp.eq.s32.totalorder %s18, 0
    %p60 = por %p58, %p59
    %p61 = scmp.ne.s32.totalorder %s49, %s50
    %p62 = scmp.eq.s32.totalorder %s19, 1
    %p63 = por %p61, %p62
    %p65 = scmp.ne.s32.totalorder %s50, %s64
    %p66 = scmp.eq.s32.totalorder %s19, 0
    %p67 = por %p65, %p66
    %s68 = ssub.s32 %s13, %s20
    %p69 = scmp.eq.s32.totalorder %s68, 0
    %s71 = sadd.s32 %s70, 1
    %s72 = scalar_select %p69, %s70, %s71
    %p75 = pneg %p69
    %p76 = scmp.eq.s32.totalorder %s13, 1
    %p77 = por %p75, %p76
    %p78 = scmp.ne.s32.totalorder %s70, %s73
    %p79 = scmp.eq.s32.totalorder %s13, 0
    %p80 = por %p78, %p79
    %p81 = scmp.ne.s32.totalorder %s70, %s73
    %p82 = scmp.eq.s32.totalorder %s18, 1
    %p83 = por %p81, %p82
    %p84 = scmp.ne.s32.totalorder %s73, %s74
    %p85 = scmp.eq.s32.totalorder %s18, 0
    %p86 = por %p84, %p85
    %p87 = scmp.ne.s32.totalorder %s73, %s74
    %p88 = scmp.eq.s32.totalorder %s19, 1
    %p89 = por %p87, %p88
    %p91 = scmp.ne.s32.totalorder %s74, %s90
    %p92 = scmp.eq.s32.totalorder %s19, 0
    %p93 = por %p91, %p92
    %s95 = sadd.s32 %s94, 1
    %p98 = scmp.eq.s32.totalorder %s13, 1
    %p99 = scmp.ne.s32.totalorder %s94, %s96
    %p100 = scmp.eq.s32.totalorder %s13, 0
    %p101 = por %p99, %p100
    %p102 = scmp.ne.s32.totalorder %s94, %s96
    %p103 = scmp.eq.s32.totalorder %s18, 1
    %p104 = por %p102, %p103
    %p105 = scmp.ne.s32.totalorder %s96, %s97
    %p106 = scmp.eq.s32.totalorder %s18, 0
    %p107 = por %p105, %p106
    %p108 = scmp.ne.s32.totalorder %s96, %s97
    %p109 = scmp.eq.s32.totalorder %s19, 1
    %p110 = por %p108, %p109
    %p112 = scmp.ne.s32.totalorder %s97, %s111
    %p113 = scmp.eq.s32.totalorder %s19, 0
    %p114 = por %p112, %p113
    %s115 = ssub.s32 %s13, %s20
    %p116 = scmp.eq.s32.totalorder %s115, 0
    %s118 = sadd.s32 %s117, 1
    %s119 = scalar_select %p116, %s117, %s118
    %p122 = pneg %p116
    %p123 = scmp.eq.s32.totalorder %s13, 1
    %p124 = por %p122, %p123
    %p125 = scmp.ne.s32.totalorder %s117, %s120
    %p126 = scmp.eq.s32.totalorder %s13, 0
    %p127 = por %p125, %p126
    %p128 = scmp.ne.s32.totalorder %s117, %s120
    %p129 = scmp.eq.s32.totalorder %s18, 1
    %p130 = por %p128, %p129
    %p131 = scmp.ne.s32.totalorder %s120, %s121
    %p132 = scmp.eq.s32.totalorder %s18, 0
    %p133 = por %p131, %p132
    %p134 = scmp.ne.s32.totalorder %s120, %s121
    %p135 = scmp.eq.s32.totalorder %s19, 1
    %p136 = por %p134, %p135
    %p138 = scmp.ne.s32.totalorder %s121, %s137
    %p139 = scmp.eq.s32.totalorder %s19, 0
    %p140 = por %p138, %p139
    %s142 = sadd.s32 %s141, 1
    %p145 = scmp.eq.s32.totalorder %s13, 1
    %p146 = scmp.ne.s32.totalorder %s141, %s143
    %p147 = scmp.eq.s32.totalorder %s13, 0
    %p148 = por %p146, %p147
    %p149 = scmp.ne.s32.totalorder %s141, %s143
    %p150 = scmp.eq.s32.totalorder %s18, 1
    %p151 = por %p149, %p150
    %p152 = scmp.ne.s32.totalorder %s143, %s144
    %p153 = scmp.eq.s32.totalorder %s18, 0
    %p154 = por %p152, %p153
    %p155 = scmp.ne.s32.totalorder %s143, %s144
    %p156 = scmp.eq.s32.totalorder %s19, 1
    %p157 = por %p155, %p156
    %p159 = scmp.ne.s32.totalorder %s144, %s158
    %p160 = scmp.eq.s32.totalorder %s19, 0
    %p161 = por %p159, %p160
    %s163 = sadd.s32 %s162, 1
    %p166 = scmp.eq.s32.totalorder %s13, 1
    %p167 = scmp.ne.s32.totalorder %s162, %s164
    %p168 = scmp.eq.s32.totalorder %s13, 0
    %p169 = por %p167, %p168
    %p170 = scmp.ne.s32.totalorder %s162, %s164
    %p171 = scmp.eq.s32.totalorder %s18, 1
    %p172 = por %p170, %p171
    %p173 = scmp.ne.s32.totalorder %s164, %s165
    %p174 = scmp.eq.s32.totalorder %s18, 0
    %p175 = por %p173, %p174
    %p176 = scmp.ne.s32.totalorder %s164, %s165
    %p177 = scmp.eq.s32.totalorder %s19, 1
    %p178 = por %p176, %p177
    %p180 = scmp.ne.s32.totalorder %s165, %s179
    %p181 = scmp.eq.s32.totalorder %s19, 0
    %p182 = por %p180, %p181
    %s183 = ssub.s32 %s13, %s20
    %p184 = scmp.eq.s32.totalorder %s183, 0
    %s186 = sadd.s32 %s185, 1
    %s187 = scalar_select %p184, %s185, %s186
    %p190 = pneg %p184
    %p191 = scmp.eq.s32.totalorder %s13, 1
    %p192 = por %p190, %p191
    %p193 = scmp.ne.s32.totalorder %s185, %s188
    %p194 = scmp.eq.s32.totalorder %s13, 0
    %p195 = por %p193, %p194
    %p196 = scmp.ne.s32.totalorder %s185, %s188
    %p197 = scmp.eq.s32.totalorder %s18, 1
    %p198 = por %p196, %p197
    %p199 = scmp.ne.s32.totalorder %s188, %s189
    %p200 = scmp.eq.s32.totalorder %s18, 0
    %p201 = por %p199, %p200
    %p202 = scmp.ne.s32.totalorder %s188, %s189
    %p203 = scmp.eq.s32.totalorder %s19, 1
    %p204 = por %p202, %p203
    %p206 = scmp.ne.s32.totalorder %s189, %s205
    %p207 = scmp.eq.s32.totalorder %s19, 0
    %p208 = por %p206, %p207
    %p209 = scmp.le.s32.totalorder 1, %s13
    %p210 = scmp.lt.s32.totalorder %s13, 3
    %p211 = pnand %p209, %p210
    %p212 = pneg %p211
    // Predicated region
    $region9: #{_softmax_lsd_impl.1} parent=5 // pred_check
      _
    $region10: #{_softmax_lsd_impl.1} parent=5 // pred_check_branch
      %214 = sbr.rel (%p211) target = $region12
    $region11: #{_softmax_lsd_impl.1} parent=5 // pred_region
      %s215 = ssub.s32 %s13, 1
      // Predicated region
      $region13: #{_softmax_lsd_impl.1} parent=11 // pred_check
        %p216 = pneg %p60
      $region14: #{_softmax_lsd_impl.1} parent=11 // pred_check_branch
        %218 = sbr.rel (%p216) target = $region16
      $region15: #{_softmax_lsd_impl.1} parent=11 // pred_region
        _
      $region16: #{_softmax_lsd_impl.1} parent=11 // pred_fallthru
        _
      // Predicated region
      $region17: #{_softmax_lsd_impl.1} parent=11 // pred_check
        %p219 = pneg %p107
      $region18: #{_softmax_lsd_impl.1} parent=11 // pred_check_branch
        %221 = sbr.rel (%p219) target = $region20
      $region19: #{_softmax_lsd_impl.1} parent=11 // pred_region
        _
      $region20: #{_softmax_lsd_impl.1} parent=11 // pred_fallthru
        _
      // Predicated region
      $region21: #{_softmax_lsd_impl.1} parent=11 // pred_check
        %p222 = pneg %p154
      $region22: #{_softmax_lsd_impl.1} parent=11 // pred_check_branch
        %224 = sbr.rel (%p222) target = $region24
      $region23: #{_softmax_lsd_impl.1} parent=11 // pred_region
        _
      $region24: #{_softmax_lsd_impl.1} parent=11 // pred_fallthru
        _
      // Predicated region
      $region25: #{_softmax_lsd_impl.1} parent=11 // pred_check
        %p225 = pneg %p175
      $region26: #{_softmax_lsd_impl.1} parent=11 // pred_check_branch
        %227 = sbr.rel (%p225) target = $region28
      $region27: #{_softmax_lsd_impl.1} parent=11 // pred_region
        _
      $region28: #{_softmax_lsd_impl.1} parent=11 // pred_fallthru
        _
    $region12: #{_softmax_lsd_impl.1} parent=5 // pred_fallthru
      _
    %p228 = scmp.lt.s32.totalorder %s13, 2
    // Predicated region
    $region29: #{_softmax_lsd_impl.1} parent=5 // pred_check
      %p229 = pneg %p228
    $region30: #{_softmax_lsd_impl.1} parent=5 // pred_check_branch
      %231 = sbr.rel (%p229) target = $region32
    $region31: #{_softmax_lsd_impl.1} parent=5 // pred_region
      // Predicated region
      $region33: #{_softmax_lsd_impl.1} parent=31 // pred_check
        %p232 = pneg %p33
      $region34: #{_softmax_lsd_impl.1} parent=31 // pred_check_branch
        %234 = sbr.rel (%p232) target = $region36
      $region35: #{_softmax_lsd_impl.1} parent=31 // pred_region
        %p235 = scmp.lt.s32.totalorder %s13, 1
        %s236 = scalar_select %p235, %s13, 1
        %s237 = smul.addr %s236, 8
        %s238 = scalar_lea.vmem %s0, %s237
      $region36: #{_softmax_lsd_impl.1} parent=31 // pred_fallthru
        _
      // Predicated region
      $region37: #{_softmax_lsd_impl.1} parent=31 // pred_check
        %p239 = pneg %p80
      $region38: #{_softmax_lsd_impl.1} parent=31 // pred_check_branch
        %241 = sbr.rel (%p239) target = $region40
      $region39: #{_softmax_lsd_impl.1} parent=31 // pred_region
        %p242 = scmp.lt.s32.totalorder %s13, 1
        %s243 = scalar_select %p242, %s13, 1
        %s244 = smul.addr %s243, 8
        %s245 = scalar_lea.vmem %s2, %s244
      $region40: #{_softmax_lsd_impl.1} parent=31 // pred_fallthru
        _
      // Predicated region
      $region41: #{_softmax_lsd_impl.1} parent=31 // pred_check
        %p246 = pneg %p127
      $region42: #{_softmax_lsd_impl.1} parent=31 // pred_check_branch
        %248 = sbr.rel (%p246) target = $region44
      $region43: #{_softmax_lsd_impl.1} parent=31 // pred_region
        %p249 = scmp.lt.s32.totalorder %s13, 1
        %s250 = scalar_select %p249, %s13, 1
        %s251 = smul.addr %s250, 8
        %s252 = scalar_lea.vmem %s4, %s251
      $region44: #{_softmax_lsd_impl.1} parent=31 // pred_fallthru
        _
    $region32: #{_softmax_lsd_impl.1} parent=5 // pred_fallthru
      _
    %p253 = scmp.le.s32.totalorder 1, %s13
    %p254 = scmp.lt.s32.totalorder %s13, 3
    %p255 = pnand %p253, %p254
    %p256 = pneg %p255
    // Predicated region
    $region45: #{_softmax_lsd_impl.1} parent=5 // pred_check
      _
    $region46: #{_softmax_lsd_impl.1} parent=5 // pred_check_branch
      %258 = sbr.rel (%p255) target = $region48
    $region47: #{_softmax_lsd_impl.1} parent=5 // pred_region
      %s259 = ssub.s32 %s13, 1
      %p260 = scmp.lt.s32.totalorder %s18, 1
      %s261 = scalar_select %p260, %s18, 1
      %s262 = smul.addr %s261, 8
      %s263 = scalar_lea.vmem %s0, %s262
      %p264 = pneg %p39
      %p265 = pneg %p36
      %p266 = pneg %p60
      %p267 = pneg %p57
      %p268 = scmp.lt.s32.totalorder %s18, 1
      %s269 = scalar_select %p268, %s18, 1
      %s270 = smul.addr %s269, 8
      %s271 = scalar_lea.vmem %s2, %s270
      %p272 = pneg %p86
      %p273 = pneg %p83
      %p274 = pneg %p107
      %p275 = pneg %p104
      %p276 = scmp.lt.s32.totalorder %s18, 1
      %s277 = scalar_select %p276, %s18, 1
      %s278 = smul.addr %s277, 8
      %s279 = scalar_lea.vmem %s4, %s278
      %p280 = pneg %p133
      %p281 = pneg %p130
      %p282 = pneg %p154
      %p283 = pneg %p151
      %p284 = pneg %p175
      %p285 = pneg %p172
      %p286 = pneg %p201
      %p287 = pneg %p198
      %p288 = scmp.lt.s32.totalorder %s18, 1
      %s289 = scalar_select %p288, %s18, 1
      %s290 = smul.addr %s289, 8
      %s291 = scalar_lea.vmem %s7, %s290
      %p292 = scmp.lt.s32.totalorder %s18, 1
      %s293 = scalar_select %p292, %s18, 1
      %s294 = smul.addr %s293, 8
      %s295 = scalar_lea.vmem %s0, %s294
      %p296 = scmp.lt.s32.totalorder %s18, 1
      %s297 = scalar_select %p296, %s18, 1
      %s298 = smul.addr %s297, 8
      %s299 = scalar_lea.vmem %s2, %s298
      %p300 = scmp.lt.s32.totalorder %s18, 1
      %s301 = scalar_select %p300, %s18, 1
      %s302 = smul.addr %s301, 8
      %s303 = scalar_lea.vmem %s4, %s302
      %p304 = scmp.lt.s32.totalorder %s18, 1
      %s305 = scalar_select %p304, %s18, 1
      %s306 = smul.addr %s305, 8
      %s307 = scalar_lea.vmem %s7, %s306
      %v308 = vld [vmem:[%s295] sm:$0xff]
      %v309 = vld [vmem:[%s1] sm:$0xff]
      %v310 = vld [vmem:[%s1 + $0x8] sm:$0xff]
      %v311 = vld [vmem:[%s1 + $0x10] sm:$0xff]
      %v312 = vld [vmem:[%s1 + $0x18] sm:$0xff]
      %v313 = vld [vmem:[%s1 + $0x20] sm:$0xff]
      %v314 = vld [vmem:[%s1 + $0x28] sm:$0xff]
      %v315 = vld [vmem:[%s1 + $0x30] sm:$0xff]
      %v316 = vld [vmem:[%s1 + $0x38] sm:$0xff]
      %v317 = vld [vmem:[%s1 + $0x40] sm:$0xff]
      %v318 = vld [vmem:[%s1 + $0x48] sm:$0xff]
      %v319 = vld [vmem:[%s1 + $0x50] sm:$0xff]
      %v320 = vld [vmem:[%s1 + $0x58] sm:$0xff]
      %v321 = vld [vmem:[%s1 + $0x60] sm:$0xff]
      %v322 = vld [vmem:[%s1 + $0x68] sm:$0xff]
      %v323 = vld [vmem:[%s1 + $0x70] sm:$0xff]
      %v324 = vld [vmem:[%s1 + $0x78] sm:$0xff]
      %v325 = vld [vmem:[%s299] sm:$0xff]
      %v326 = vld [vmem:[%s3] sm:$0xff]
      %v327 = vld [vmem:[%s3 + $0x8] sm:$0xff]
      %v328 = vld [vmem:[%s3 + $0x10] sm:$0xff]
      %v329 = vld [vmem:[%s3 + $0x18] sm:$0xff]
      %v330 = vld [vmem:[%s3 + $0x20] sm:$0xff]
      %v331 = vld [vmem:[%s3 + $0x28] sm:$0xff]
      %v332 = vld [vmem:[%s3 + $0x30] sm:$0xff]
      %v333 = vld [vmem:[%s3 + $0x38] sm:$0xff]
      %v334 = vld [vmem:[%s3 + $0x40] sm:$0xff]
      %v335 = vld [vmem:[%s3 + $0x48] sm:$0xff]
      %v336 = vld [vmem:[%s3 + $0x50] sm:$0xff]
      %v337 = vld [vmem:[%s3 + $0x58] sm:$0xff]
      %v338 = vld [vmem:[%s3 + $0x60] sm:$0xff]
      %v339 = vld [vmem:[%s3 + $0x68] sm:$0xff]
      %v340 = vld [vmem:[%s3 + $0x70] sm:$0xff]
      %v341 = vld [vmem:[%s3 + $0x78] sm:$0xff]
      %v342 = vld [vmem:[%s303] sm:$0xff]
      %v343 = vld [vmem:[%s5] sm:$0x1]
      %v344 = vld [vmem:[%s6] sm:$0xff]
      %v345 = vld [vmem:[%s6 + $0x8] sm:$0xff]
      %v346 = vld [vmem:[%s6 + $0x10] sm:$0xff]
      %v347 = vld [vmem:[%s6 + $0x18] sm:$0xff]
      %v348 = vld [vmem:[%s6 + $0x20] sm:$0xff]
      %v349 = vld [vmem:[%s6 + $0x28] sm:$0xff]
      %v350 = vld [vmem:[%s6 + $0x30] sm:$0xff]
      %v351 = vld [vmem:[%s6 + $0x38] sm:$0xff]
      %v352 = vld [vmem:[%s6 + $0x40] sm:$0xff]
      %v353 = vld [vmem:[%s6 + $0x48] sm:$0xff]
      %v354 = vld [vmem:[%s6 + $0x50] sm:$0xff]
      %v355 = vld [vmem:[%s6 + $0x58] sm:$0xff]
      %v356 = vld [vmem:[%s6 + $0x60] sm:$0xff]
      %v357 = vld [vmem:[%s6 + $0x68] sm:$0xff]
      %v358 = vld [vmem:[%s6 + $0x70] sm:$0xff]
      %v359 = vld [vmem:[%s6 + $0x78] sm:$0xff]
      %360 = vmatpush.msra.mxu0 %v359
      %361 = vmatpush.msra.mxu0 %v358
      %362 = vmatpush.msra.mxu0 %v357
      %363 = vmatpush.msra.mxu0 %v356
      %364 = vmatpush.msra.mxu0 %v355
      %365 = vmatpush.msra.mxu0 %v354
      %366 = vmatpush.msra.mxu0 %v353
      %367 = vmatpush.msra.mxu0 %v352
      %368 = vmatpush.msra.mxu0 %v351
      %369 = vmatpush.msra.mxu0 %v350
      %370 = vmatpush.msra.mxu0 %v349
      %371 = vmatpush.msra.mxu0 %v348
      %372 = vmatpush.msra.mxu0 %v347
      %373 = vmatpush.msra.mxu0 %v346
      %374 = vmatpush.msra.mxu0 %v345
      %375 = vmatpush.msra.mxu0 %v344
      %376 = vmatmul.f32.gmra.mxu0 %v308
      %v377 = vpop.f32.mrf.mxu0
      %v378 = vadd.f32 0.0, %v377
      %379 = vdwg.mxu0
      %v380 = vmul.f32 %v378, 20.0
      %vm381 = vcmask 130048
      %v382 = vsel %vm381, %v380, -inf
      %383 = vmax.xlane.f32.xlu0 %v382
      %v384 = vpop.xlane.xlu0 %383
      %v385 = vsub.f32 %v380, %v384
      %v386 = vmul.f32 %v385, 1.442695
      %v387 = vpow.pop %v386
      %v388 = vsel %vm381, %v387, 0.0
      %389 = vadd.xlane.f32.xlu0 %v388
      %v390 = vpop.xlane.xlu0 %389
      %v391 = vlog2.pop %v390
      %v392 = vmul.f32 %v391, 0.6931472
      %v393 = vadd.f32 %v384, %v392
      %v394 = vlaneseq
      %v395 = vand.u32 %v394, 127
      %396 = vset.pattern.permute.xlu0 0
      %397 = vperm.xlu0 %396, %v342
      %v398 = vpop.permute.xlu0 %397
      %vm399 = vcmp.eq.s32.totalorder %v395, %v398
      %v400 = vsel %vm399, 1, 0
      %v401 = vcvt.s32.f32 %v400
      %v402 = vmul.f32 %v380, %v401
      %v403 = vsel %vm381, %v402, 0.0
      %404 = vadd.xlane.f32.xlu0 %v403
      %v405 = vpop.xlane.xlu0 %404
      %v406 = vsub.f32 %v393, %v405
      %407 = vmatpush.msra.mxu0 %v324
      %408 = vmatpush.msra.mxu0 %v323
      %409 = vmatpush.msra.mxu0 %v322
      %410 = vmatpush.msra.mxu0 %v321
      %411 = vmatpush.msra.mxu0 %v320
      %412 = vmatpush.msra.mxu0 %v319
      %413 = vmatpush.msra.mxu0 %v318
      %414 = vmatpush.msra.mxu0 %v317
      %415 = vmatpush.msra.mxu0 %v316
      %416 = vmatpush.msra.mxu0 %v315
      %417 = vmatpush.msra.mxu0 %v314
      %418 = vmatpush.msra.mxu0 %v313
      %419 = vmatpush.msra.mxu0 %v312
      %420 = vmatpush.msra.mxu0 %v311
      %421 = vmatpush.msra.mxu0 %v310
      %422 = vmatpush.msra.mxu0 %v309
      %423 = vmatmul.f32.gmra.mxu0 %v308
      %v424 = vpop.f32.mrf.mxu0
      %v425 = vadd.f32 0.0, %v424
      %426 = vdwg.mxu0
      %427 = vmatpush.msra.mxu0 %v341
      %428 = vmatpush.msra.mxu0 %v340
      %429 = vmatpush.msra.mxu0 %v339
      %430 = vmatpush.msra.mxu0 %v338
      %431 = vmatpush.msra.mxu0 %v337
      %432 = vmatpush.msra.mxu0 %v336
      %433 = vmatpush.msra.mxu0 %v335
      %434 = vmatpush.msra.mxu0 %v334
      %435 = vmatpush.msra.mxu0 %v333
      %436 = vmatpush.msra.mxu0 %v332
      %437 = vmatpush.msra.mxu0 %v331
      %438 = vmatpush.msra.mxu0 %v330
      %439 = vmatpush.msra.mxu0 %v329
      %440 = vmatpush.msra.mxu0 %v328
      %441 = vmatpush.msra.mxu0 %v327
      %442 = vmatpush.msra.mxu0 %v326
      %443 = vmatmul.f32.gmra.mxu0 %v325
      %v444 = vpop.f32.mrf.mxu0
      %v445 = vadd.f32 0.0, %v444
      %446 = vdwg.mxu0
      %v447 = vperm.slane %v343, 0
      %vm448 = vcmp.eq.s32.totalorder %v398, %v447
      %v449 = vsel %vm448, 0.25, 0.0625
      %v450 = vmul.f32 %v425, %v449
      %v451 = vmul.f32 %v445, %v449
      %v452 = vsel %vm381, %v450, -inf
      %453 = vmax.xlane.f32.xlu0 %v452
      %v454 = vpop.xlane.xlu0 %453
      %v455 = vsel %vm381, %v451, -inf
      %456 = vmax.xlane.f32.xlu0 %v455
      %v457 = vpop.xlane.xlu0 %456
      %v458 = vsub.f32 %v450, %v454
      %v459 = vmul.f32 %v458, 1.442695
      %v460 = vpow.pop %v459
      %v461 = vsub.f32 %v451, %v457
      %v462 = vmul.f32 %v461, 1.442695
      %v463 = vpow.pop %v462
      %v464 = vsel %vm381, %v460, 0.0
      %465 = vadd.xlane.f32.xlu0 %v464
      %v466 = vpop.xlane.xlu0 %465
      %v467 = vsel %vm381, %v463, 0.0
      %468 = vadd.xlane.f32.xlu0 %v467
      %v469 = vpop.xlane.xlu0 %468
      %v470 = vsub.f32 %v451, %v450
      %v471 = vmul.f32 %v463, %v470
      %v472 = vsel %vm381, %v471, 0.0
      %473 = vadd.xlane.f32.xlu0 %v472
      %v474 = vpop.xlane.xlu0 %473
      %v475 = vrcp.pop %v469
      %v476 = vmul.f32 %v469, %v475
      %v477 = vsub.f32 1.0, %v476
      %v478 = vmul.f32 %v475, %v477
      %v479 = vadd.f32 %v475, %v478
      %vm480 = vweird.f32 %v469
      %vm481 = vweird.f32 %v475
      %vm482 = vmor %vm480, %vm481
      %v483 = vsel %vm482, %v475, %v479
      %v484 = vand.u32 2147483647, %v469
      %vm485 = vcmp.eq.f32.partialorder %v484, 8.507059e+37
      %v486 = vand.u32 %v469, 2147483648
      %v487 = vor.u32 1.1754944e-38, %v486
      %v488 = vsel %vm485, %v487, %v483
      %v489 = vmul.f32 %v474, %v488
      %v490 = vsub.f32 %v457, %v454
      %v491 = vsub.f32 %v489, %v490
      %v492 = vlog2.pop %v469
      %v493 = vmul.f32 %v492, 0.6931472
      %v494 = vlog2.pop %v466
      %v495 = vmul.f32 %v494, 0.6931472
      %v496 = vsub.f32 %v493, %v495
      %v497 = vsub.f32 %v491, %v496
      %vm498 = vcmp.eq.s32.totalorder %v395, 0
      %vm499 = vcmp.eq.s32.totalorder %v395, 1
      %v500 = vsel %vm499, %v497, 0.0
      %v501 = vsel %vm498, %v406, %v500
      %502 = vst [vmem:[%s307] sm:$0xff] %v501
      %p503 = scmp.lt.s32.totalorder %s18, 1
      %s504 = scalar_select %p503, %s18, 1
      %s505 = smul.addr %s504, 8
      %s506 = scalar_lea.vmem %s7, %s505
      // Predicated region
      $region49: #{_softmax_lsd_impl.1} parent=47 // pred_check
        %p507 = pneg %p198
      $region50: #{_softmax_lsd_impl.1} parent=47 // pred_check_branch
        %509 = sbr.rel (%p507) target = $region52
      $region51: #{_softmax_lsd_impl.1} parent=47 // pred_region
        _
      $region52: #{_softmax_lsd_impl.1} parent=47 // pred_fallthru
        _
    $region48: #{_softmax_lsd_impl.1} parent=5 // pred_fallthru
      _
    %p510 = scmp.le.s32.totalorder 2, %s13
    // Predicated region
    $region53: #{_softmax_lsd_impl.1} parent=5 // pred_check
      %p511 = pneg %p510
    $region54: #{_softmax_lsd_impl.1} parent=5 // pred_check_branch
      %513 = sbr.rel (%p511) target = $region56
    $region55: #{_softmax_lsd_impl.1} parent=5 // pred_region
      %s514 = ssub.s32 %s13, 2
      // Predicated region
      $region57: #{_softmax_lsd_impl.1} parent=55 // pred_check
        %p515 = pneg %p204
      $region58: #{_softmax_lsd_impl.1} parent=55 // pred_check_branch
        %517 = sbr.rel (%p515) target = $region60
      $region59: #{_softmax_lsd_impl.1} parent=55 // pred_region
        %p518 = scmp.lt.s32.totalorder %s19, 1
        %s519 = scalar_select %p518, %s19, 1
        %s520 = smul.addr %s519, 8
        %s521 = scalar_lea.vmem %s7, %s520
      $region60: #{_softmax_lsd_impl.1} parent=55 // pred_fallthru
        _
    $region56: #{_softmax_lsd_impl.1} parent=5 // pred_fallthru
      _
  $region6: #{_softmax_lsd_impl.1} parent=0 // loop_footer
    %s17 = sadd.s32 1, %s13
  $region7: #{_softmax_lsd_impl.1} parent=0 // loop_footer_branch
    %12 = sbr.rel target = $region3
  $region8: #{_softmax_lsd_impl.1} parent=0 // loop_exit
    _

</llo_original>
